<compile_context>
chip_gen: v7x
topology: tpu7x:2x2x1
jax: 0.10.0
libtpu: 0.0.40
codegen_flags: <defaults>
</compile_context>

<pallas_src>
import functools

import jax
import jax.numpy as jnp
from jax import lax
from jax.experimental import pallas as pl
from jax.experimental.pallas import tpu as pltpu

NEG = -1e30  # finite "minus infinity": keeps masked arithmetic NaN-free


def _cdiv(a, b):
    return (a + b - 1) // b


def _next_pow2(x):
    p = 1
    while p < x:
        p *= 2
    return p


def crf_logz_kernel(max_len_ref,                                   # SMEM scalar prefetch
                    feat_ref, w_ref, bias_ref, et_ref, cm_ref, tbos_ref, lens_ref,
                    out_ref,
                    emit_sc, cur_sc,
                    *, t_tile, b_tile, n_pad, b_size, bos_ix, eos_ix):
    TT, TB, NP = t_tile, b_tile, n_pad
    bi = pl.program_id(0)          # batch tile   ("parallel")
    ti = pl.program_id(1)          # time tile    ("arbitrary" / sequential)

    # ---- emission scores for this tile: one lane-dense bf16 MXU matmul ----
    emit = jnp.dot(feat_ref[...], w_ref[...],
                   preferred_element_type=jnp.float32) + bias_ref[...]   # (SB, NP) f32
    emit_sc[...] = emit.astype(jnp.bfloat16)     # bf16 scratch: halves vst/vld traffic

    lens_col = lens_ref[...]                     # (TB, 1) int32
    cm = cm_ref[...]                             # (1, NP)  f32   colmax(T)
    et = et_ref[...]                             # (NP, NP) bf16  exp(T - colmax)

    # ---- per-batch-tile init at the first time tile ----
    @pl.when(ti == 0)
    def _init():
        # cur0[b, j] = emit[t=0, b, bos] + T[bos, j]
        emit0 = emit[0:TB, :]
        cur_sc[...] = emit0[:, bos_ix:bos_ix + 1] + tbos_ref[...]

    # ---- forward (log-partition) recursion; cur carried in vregs ----
    max_len = max_len_ref[bi]
    n_live = jnp.minimum(jnp.maximum(max_len - ti * TT, 0), TT)

    @pl.when(n_live > 0)           # skip fully padded time tiles entirely
    def _recur():
        def step(lt, cur):
            t = ti * TT + lt
            off = pl.multiple_of(lt * TB, TB)
            emit_t = emit_sc[pl.ds(off, TB), :].astype(jnp.float32)       # (TB, NP)
            # new[b, j] = logsumexp_i(cur[b,i] + emit_t[b,i] + T[i,j])
            a = cur + emit_t
            m = jnp.max(a, axis=1, keepdims=True)
            p = jnp.exp(a - m).astype(jnp.bfloat16)
            s = jnp.dot(p, et, preferred_element_type=jnp.float32)        # bf16 MXU
            new = m + cm + jnp.log(s)
            ok = jnp.logical_and(t >= 1, t < lens_col)                    # (TB, 1)
            return jnp.where(ok, new, cur)

        unroll = TT if TT <= 8 else 4
        cur = lax.fori_loop(0, TT, step, cur_sc[...], unroll=unroll)
        cur_sc[...] = cur          # persist across time tiles / for finalize

    # ---- finalize: partial logZ for this batch tile ----
    @pl.when(ti == pl.num_programs(1) - 1)
    def _fin():
        cur = cur_sc[...]
        brow = bi * TB + lax.broadcasted_iota(jnp.int32, (TB, 1), 0)
        valid = brow < b_size
        log_z = jnp.sum(jnp.where(valid, cur[:, eos_ix:eos_ix + 1], 0.0))
        out_ref[...] = jnp.zeros((1, NP), jnp.float32) + log_z


def crf_loss(features, tags, seq_lens, W, bias, transitions, *,
             bos_ix, eos_ix, pad_ix, use_bf16=True, t_tile=None, b_tile=None):
    s_len, b_size, d = features.shape
    n_tags = transitions.shape[0]
    NP = 128 * _cdiv(n_tags, 128)                  # lane-dense padded tag dim
    DP = 128 * _cdiv(d, 128)                       # lane-dense padded feature dim

    comp_dtype = jnp.bfloat16 if use_bf16 else jnp.float32

    # ---- batch tiling (>=16 for bf16 sublane tile; prefer >=2 tiles on v7x) ----
    if b_tile is None:
        b_tile = min(256, max(16, _next_pow2(b_size)))
        if b_tile > 16 and b_size > 16 and _cdiv(b_size, b_tile) == 1:
            b_tile = max(16, b_tile // 2)          # give both v7x TCs work
    b_pad = b_tile * _cdiv(b_size, b_tile)
    n_bt = b_pad // b_tile

    # ---- time tiling from a per-generation-safe VMEM budget (~12 MiB) ----
    if t_tile is None:
        budget = 12 * 1024 * 1024
        per_step = b_tile * (2 * DP * 2 + NP * 2)  # 2x-buffered bf16 feats + bf16 emit_sc
        t_tile = max(1, min(128, s_len, budget // per_step))
    s_pad = t_tile * _cdiv(s_len, t_tile)
    n_tt = s_pad // t_tile
    SB = t_tile * b_tile

    # ---- pad / relayout inputs (padding is masked in-kernel) ----
    feats = jnp.zeros((s_pad, b_pad, DP), comp_dtype)
    feats = feats.at[:s_len, :b_size, :d].set(features.astype(comp_dtype))
    # pre-flatten each (t_tile, b_tile) tile into a dense (SB, DP) slab
    feats = feats.reshape(n_tt, t_tile, n_bt, b_tile, DP)
    feats = feats.transpose(0, 2, 1, 3, 4).reshape(n_tt, n_bt, SB, DP)

    Wt = jnp.zeros((DP, NP), comp_dtype).at[:d, :n_tags].set(W.T.astype(comp_dtype))
    bias_p = jnp.zeros((1, NP), jnp.float32).at[0, :n_tags].set(bias.astype(jnp.float32))

    trans_p = jnp.full((NP, NP), NEG, jnp.float32)
    trans_p = trans_p.at[:n_tags, :n_tags].set(transitions.astype(jnp.float32))
    cm = jnp.max(trans_p, axis=0, keepdims=True)              # (1, NP) f32
    et = jnp.exp(trans_p - cm).astype(jnp.bfloat16)           # (NP, NP), values <= 1
    tbos = trans_p[bos_ix:bos_ix + 1, :]                      # (1, NP) f32

    lens_i = seq_lens.astype(jnp.int32)
    lens_p = jnp.zeros((b_pad, 1), jnp.int32).at[:b_size, 0].set(lens_i)
    max_len_tiles = jnp.max(lens_p.reshape(n_bt, b_tile), axis=1)      # (n_bt,)

    kernel = functools.partial(
        crf_logz_kernel, t_tile=t_tile, b_tile=b_tile, n_pad=NP,
        b_size=b_size, bos_ix=bos_ix, eos_ix=eos_ix)

    out = pl.pallas_call(
        kernel,
        out_shape=jax.ShapeDtypeStruct((n_bt, 1, NP), jnp.float32),
        grid_spec=pltpu.PrefetchScalarGridSpec(
            num_scalar_prefetch=1,
            grid=(n_bt, n_tt),
            in_specs=[
                pl.BlockSpec((None, None, SB, DP), lambda bi, ti, ml: (ti, bi, 0, 0)),  # features
                pl.BlockSpec((DP, NP), lambda bi, ti, ml: (0, 0)),                      # W^T (padded)
                pl.BlockSpec((1, NP), lambda bi, ti, ml: (0, 0)),                       # bias
                pl.BlockSpec((NP, NP), lambda bi, ti, ml: (0, 0)),                      # exp(T - cm) bf16
                pl.BlockSpec((1, NP), lambda bi, ti, ml: (0, 0)),                       # colmax(T)
                pl.BlockSpec((1, NP), lambda bi, ti, ml: (0, 0)),                       # T[bos, :]
                pl.BlockSpec((b_tile, 1), lambda bi, ti, ml: (bi, 0)),                  # seq_lens
            ],
            out_specs=pl.BlockSpec((None, 1, NP), lambda bi, ti, ml: (bi, 0, 0)),
            scratch_shapes=[
                pltpu.VMEM((SB, NP), jnp.bfloat16),      # emission tile
                pltpu.VMEM((b_tile, NP), jnp.float32),   # recursion state `cur`
            ]),
        compiler_params=pltpu.CompilerParams(
            dimension_semantics=("parallel", "arbitrary"),
            vmem_limit_bytes=32 * 1024 * 1024),
    )(max_len_tiles, feats, Wt, bias_p, et, cm, tbos, lens_p)

    log_z = jnp.sum(out[:, 0, 0])

    # ---- gold (numerator) score: plain XLA gathers in the wrapper ----
    tags_i = tags.astype(jnp.int32)
    next_i = jnp.concatenate([tags_i[1:], jnp.full((1, b_size), pad_ix, jnp.int32)], 0)
    emit_g = jnp.einsum("sbd,nd->sbn",
                        features.astype(comp_dtype), W.astype(comp_dtype),
                        preferred_element_type=jnp.float32) + bias.astype(jnp.float32)
    gold_emit = jnp.take_along_axis(emit_g, tags_i[:, :, None], axis=2)[..., 0]   # (s, b)
    gold_trans = transitions.astype(jnp.float32)[tags_i, next_i]                  # (s, b)
    mask = (jnp.arange(s_len)[:, None] < lens_i[None, :]).astype(jnp.float32)
    gold = jnp.sum((gold_emit + gold_trans) * mask)

    return log_z - gold


def crf_loss_ref(features, tags, seq_lens, W, bias, trans,
                 *, bos_ix, eos_ix, pad_ix, use_bf16=True):
    """Pure-JAX reference mirroring the PyTorch forward() (same bf16 input cast)."""
    s_len, b_size, _ = features.shape
    if use_bf16:
        features = features.astype(jnp.bfloat16).astype(jnp.float32)
        W = W.astype(jnp.bfloat16).astype(jnp.float32)
    emit = features @ W.T + bias                                       # (s, b, n)
    crf = emit[:, :, :, None] + trans[None, None, :, :]                # (s, b, n, n)
    nxt = jnp.concatenate([tags[1:], jnp.full((1, b_size), pad_ix, tags.dtype)], 0)
    gold_per = crf[jnp.arange(s_len)[:, None], jnp.arange(b_size)[None, :], tags, nxt]
    t_idx = jnp.arange(s_len)[:, None]
    gold = jnp.sum(gold_per * (t_idx < seq_lens[None, :]))
    cur = crf[0, :, bos_ix, :]
    for idx in range(1, s_len):
        ns = cur[:, :, None] + crf[idx]
        lse = jax.scipy.special.logsumexp(ns, axis=1)
        mask = (idx < seq_lens)[:, None].astype(jnp.float32)
        cur = mask * lse + (1.0 - mask) * cur
    return jnp.sum(cur[:, eos_ix]) - gold


if __name__ == "__main__":
    s_len, b_size, feature_dim, tags_num = 8, 2, 32, 6
    bos_ix, eos_ix, pad_ix = 4, 5, 0

    key = jax.random.PRNGKey(0)
    k1, k2, k3, k4, k5 = jax.random.split(key, 5)
    features = jax.random.normal(k1, (s_len, b_size, feature_dim), jnp.float32)
    W = jax.random.normal(k2, (tags_num, feature_dim), jnp.float32) * 0.1
    bias = jax.random.normal(k3, (tags_num,), jnp.float32) * 0.1
    transitions = jax.random.normal(k4, (tags_num, tags_num), jnp.float32) * 0.1
    tags = jax.random.randint(k5, (s_len, b_size), 0, tags_num, jnp.int32)
    seq_lens = jnp.array([8, 5], jnp.int32)

    out = crf_loss(features, tags, seq_lens, W, bias, transitions,
                   bos_ix=bos_ix, eos_ix=eos_ix, pad_ix=pad_ix)
    out = jax.block_until_ready(out)

    ref = crf_loss_ref(features, tags, seq_lens, W, bias, transitions,
                       bos_ix=bos_ix, eos_ix=eos_ix, pad_ix=pad_ix)
    # bf16 recursion (et / p / emit scratch) gives ~1e-3-level relative error;
    # real bugs (wrong init / mask / padding) produce O(1)+ deviations.
    tol = 5e-3 * max(1.0, abs(float(ref)))
    assert abs(float(out) - float(ref)) <= tol, (float(out), float(ref))
    print("KERNEL_OK")
</pallas_src>

<mosaic_0001>
module attributes {stable_mosaic.version = 11 : i64} {
  func.func @crf_logz_kernel(%arg0: i32, %arg1: i32, %arg2: memref<1xi32, #tpu.memory_space<smem>>, %arg3: memref<1x1x128x128xbf16, #tpu.memory_space<vmem>>, %arg4: memref<128x128xbf16, #tpu.memory_space<vmem>>, %arg5: memref<1x128xf32, #tpu.memory_space<vmem>>, %arg6: memref<128x128xbf16, #tpu.memory_space<vmem>>, %arg7: memref<1x128xf32, #tpu.memory_space<vmem>>, %arg8: memref<1x128xf32, #tpu.memory_space<vmem>>, %arg9: memref<16x1xi32, #tpu.memory_space<vmem>>, %arg10: memref<1x1x128xf32, #tpu.memory_space<vmem>>, %arg11: memref<128x128xbf16, #tpu.memory_space<vmem>>, %arg12: memref<16x128xf32, #tpu.memory_space<vmem>>) attributes {dimension_semantics = [#tpu.dimension_semantics<parallel>, #tpu.dimension_semantics<arbitrary>], iteration_bounds = array<i64: 1, 1>, scalar_prefetch = 1 : i64, scratch_operands = 2 : i64, tpu.core_type = #tpu.core_type<tc>, window_params = [{transform_indices = @transform_0, window_bounds = array<i64: 1, 1, 128, 128>}, {pipeline_mode = #tpu.pipeline_mode<synchronous>, transform_indices = @transform_1, window_bounds = array<i64: 128, 128>}, {pipeline_mode = #tpu.pipeline_mode<synchronous>, transform_indices = @transform_2, window_bounds = array<i64: 1, 128>}, {pipeline_mode = #tpu.pipeline_mode<synchronous>, transform_indices = @transform_3, window_bounds = array<i64: 128, 128>}, {pipeline_mode = #tpu.pipeline_mode<synchronous>, transform_indices = @transform_4, window_bounds = array<i64: 1, 128>}, {pipeline_mode = #tpu.pipeline_mode<synchronous>, transform_indices = @transform_5, window_bounds = array<i64: 1, 128>}, {transform_indices = @transform_6, window_bounds = array<i64: 16, 1>}, {transform_indices = @transform_7, window_bounds = array<i64: 1, 1, 128>}]} {
    %c0 = arith.constant 0 : index
    %c0_0 = arith.constant 0 : index
    %c0_1 = arith.constant 0 : index
    %c0_2 = arith.constant 0 : index
    %0 = vector.load %arg3[%c0, %c0_0, %c0_1, %c0_2] : memref<1x1x128x128xbf16, #tpu.memory_space<vmem>>, vector<1x1x128x128xbf16>
    %1 = vector.shape_cast %0 : vector<1x1x128x128xbf16> to vector<128x128xbf16>
    %c0_3 = arith.constant 0 : index
    %c0_4 = arith.constant 0 : index
    %2 = vector.load %arg4[%c0_3, %c0_4] : memref<128x128xbf16, #tpu.memory_space<vmem>>, vector<128x128xbf16>
    %cst = arith.constant dense<0.000000e+00> : vector<128x128xf32>
    %3 = tpu.matmul %1, %2, %cst {dimension_numbers = #tpu.dot_dimension_numbers<[1], [0], [0], [1], [0, 0, 1, 1], [], []>} : vector<128x128xbf16>, vector<128x128xbf16>, vector<128x128xf32> -> vector<128x128xf32>
    %c0_5 = arith.constant 0 : index
    %c0_6 = arith.constant 0 : index
    %4 = vector.load %arg5[%c0_5, %c0_6] : memref<1x128xf32, #tpu.memory_space<vmem>>, vector<1x128xf32>
    %5 = vector.broadcast %4 : vector<1x128xf32> to vector<128x128xf32>
    %6 = arith.addf %3, %5 : vector<128x128xf32>
    %7 = arith.truncf %6 : vector<128x128xf32> to vector<128x128xbf16>
    %c0_7 = arith.constant 0 : index
    %c0_8 = arith.constant 0 : index
    %8 = vector.load %arg11[%c0_7, %c0_8] : memref<128x128xbf16, #tpu.memory_space<vmem>>, vector<128x128xbf16>
    tpu.vector_store %arg11[%c0_7, %c0_8], %7 {strides = array<i32>} : memref<128x128xbf16, #tpu.memory_space<vmem>>, vector<128x128xbf16>,
    %c0_9 = arith.constant 0 : index
    %c0_10 = arith.constant 0 : index
    %9 = vector.load %arg9[%c0_9, %c0_10] : memref<16x1xi32, #tpu.memory_space<vmem>>, vector<16x1xi32>
    %c0_11 = arith.constant 0 : index
    %c0_12 = arith.constant 0 : index
    %10 = vector.load %arg7[%c0_11, %c0_12] : memref<1x128xf32, #tpu.memory_space<vmem>>, vector<1x128xf32>
    %c0_13 = arith.constant 0 : index
    %c0_14 = arith.constant 0 : index
    %11 = vector.load %arg6[%c0_13, %c0_14] : memref<128x128xbf16, #tpu.memory_space<vmem>>, vector<128x128xbf16>
    %c0_i32 = arith.constant 0 : i32
    %12 = arith.cmpi eq, %arg1, %c0_i32 : i32
    %13 = arith.extui %12 : i1 to i32
    %c0_i32_15 = arith.constant 0 : i32
    %14 = arith.cmpi ne, %13, %c0_i32_15 : i32
    scf.if %14 {
      %27 = vector.extract_strided_slice %6 {offsets = [0, 0], sizes = [16, 128], strides = [1, 1]} : vector<128x128xf32> to vector<16x128xf32>
      %28 = vector.extract_strided_slice %27 {offsets = [0, 4], sizes = [16, 1], strides = [1, 1]} : vector<16x128xf32> to vector<16x1xf32>
      %c0_22 = arith.constant 0 : index
      %c0_23 = arith.constant 0 : index
      %29 = vector.load %arg8[%c0_22, %c0_23] : memref<1x128xf32, #tpu.memory_space<vmem>>, vector<1x128xf32>
      %30 = vector.broadcast %28 : vector<16x1xf32> to vector<16x128xf32>
      %31 = vector.broadcast %29 : vector<1x128xf32> to vector<16x128xf32>
      %32 = arith.addf %30, %31 : vector<16x128xf32>
      %c0_24 = arith.constant 0 : index
      %c0_25 = arith.constant 0 : index
      %33 = vector.load %arg12[%c0_24, %c0_25] : memref<16x128xf32, #tpu.memory_space<vmem>>, vector<16x128xf32>
      tpu.vector_store %arg12[%c0_24, %c0_25], %32 {strides = array<i32>} : memref<16x128xf32, #tpu.memory_space<vmem>>, vector<16x128xf32>,
    } else {
    }
    %15 = arith.index_cast %arg0 : i32 to index
    %16 = memref.load %arg2[%15] : memref<1xi32, #tpu.memory_space<smem>>
    %c8_i32 = arith.constant 8 : i32
    %17 = arith.muli %arg1, %c8_i32 : i32
    %18 = arith.subi %16, %17 : i32
    %c0_i32_16 = arith.constant 0 : i32
    %19 = arith.maxsi %18, %c0_i32_16 : i32
    %c8_i32_17 = arith.constant 8 : i32
    %20 = arith.minsi %19, %c8_i32_17 : i32
    %c0_i32_18 = arith.constant 0 : i32
    %21 = arith.cmpi sgt, %20, %c0_i32_18 : i32
    %22 = arith.extui %21 : i1 to i32
    %c0_i32_19 = arith.constant 0 : i32
    %23 = arith.cmpi ne, %22, %c0_i32_19 : i32
    scf.if %23 {
      %c0_22 = arith.constant 0 : index
      %c0_23 = arith.constant 0 : index
      %27 = vector.load %arg12[%c0_22, %c0_23] : memref<16x128xf32, #tpu.memory_space<vmem>>, vector<16x128xf32>
      %c0_i32_24 = arith.constant 0 : i32
      %c8_i32_25 = arith.constant 8 : i32
      %28 = arith.muli %arg1, %c8_i32_25 : i32
      %29 = arith.addi %28, %c0_i32_24 : i32
      %c16_i32 = arith.constant 16 : i32
      %30 = arith.muli %c0_i32_24, %c16_i32 : i32
      %31 = tpu.assume_multiple %30, 16 : i32
      %32 = arith.index_cast %31 : i32 to index
      %c0_26 = arith.constant 0 : index
      %33 = vector.load %arg11[%32, %c0_26] : memref<128x128xbf16, #tpu.memory_space<vmem>>, vector<16x128xbf16>
      %34 = arith.extf %33 : vector<16x128xbf16> to vector<16x128xf32>
      %35 = arith.addf %27, %34 : vector<16x128xf32>
      %cst_27 = arith.constant dense<0xFF800000> : vector<16xf32>
      %36 = vector.multi_reduction <maximumf>, %35, %cst_27 [1] : vector<16x128xf32> to vector<16xf32>
      %37 = vector.shape_cast %36 : vector<16xf32> to vector<16x1xf32>
      %38 = vector.broadcast %37 : vector<16x1xf32> to vector<16x128xf32>
      %39 = arith.subf %35, %38 : vector<16x128xf32>
      %40 = math.exp %39 : vector<16x128xf32>
      %41 = arith.truncf %40 : vector<16x128xf32> to vector<16x128xbf16>
      %cst_28 = arith.constant dense<0.000000e+00> : vector<16x128xf32>
      %42 = tpu.matmul %41, %11, %cst_28 {dimension_numbers = #tpu.dot_dimension_numbers<[1], [0], [0], [1], [0, 0, 1, 1], [], []>} : vector<16x128xbf16>, vector<128x128xbf16>, vector<16x128xf32> -> vector<16x128xf32>
      %43 = vector.broadcast %37 : vector<16x1xf32> to vector<16x128xf32>
      %44 = vector.broadcast %10 : vector<1x128xf32> to vector<16x128xf32>
      %45 = arith.addf %43, %44 : vector<16x128xf32>
      %46 = math.log %42 : vector<16x128xf32>
      %47 = arith.addf %45, %46 : vector<16x128xf32>
      %c1_i32 = arith.constant 1 : i32
      %48 = arith.cmpi sge, %29, %c1_i32 : i32
      %49 = vector.broadcast %29 : i32 to vector<16x1xi32>
      %50 = arith.cmpi slt, %49, %9 : vector<16x1xi32>
      %51 = vector.broadcast %48 : i1 to vector<16x1xi1>
      %52 = arith.andi %51, %50 : vector<16x1xi1>
      %53 = vector.shape_cast %52 : vector<16x1xi1> to vector<16x1xi1>
      %54 = vector.broadcast %53 : vector<16x1xi1> to vector<16x128xi1>
      %55 = arith.select %54, %47, %27 : vector<16x128xi1>, vector<16x128xf32>
      %c1_i32_29 = arith.constant 1 : i32
      %c8_i32_30 = arith.constant 8 : i32
      %56 = arith.muli %arg1, %c8_i32_30 : i32
      %57 = arith.addi %56, %c1_i32_29 : i32
      %c16_i32_31 = arith.constant 16 : i32
      %58 = arith.muli %c1_i32_29, %c16_i32_31 : i32
      %59 = tpu.assume_multiple %58, 16 : i32
      %60 = arith.index_cast %59 : i32 to index
      %c0_32 = arith.constant 0 : index
      %61 = vector.load %arg11[%60, %c0_32] : memref<128x128xbf16, #tpu.memory_space<vmem>>, vector<16x128xbf16>
      %62 = arith.extf %61 : vector<16x128xbf16> to vector<16x128xf32>
      %63 = arith.addf %55, %62 : vector<16x128xf32>
      %cst_33 = arith.constant dense<0xFF800000> : vector<16xf32>
      %64 = vector.multi_reduction <maximumf>, %63, %cst_33 [1] : vector<16x128xf32> to vector<16xf32>
      %65 = vector.shape_cast %64 : vector<16xf32> to vector<16x1xf32>
      %66 = vector.broadcast %65 : vector<16x1xf32> to vector<16x128xf32>
      %67 = arith.subf %63, %66 : vector<16x128xf32>
      %68 = math.exp %67 : vector<16x128xf32>
      %69 = arith.truncf %68 : vector<16x128xf32> to vector<16x128xbf16>
      %cst_34 = arith.constant dense<0.000000e+00> : vector<16x128xf32>
      %70 = tpu.matmul %69, %11, %cst_34 {dimension_numbers = #tpu.dot_dimension_numbers<[1], [0], [0], [1], [0, 0, 1, 1], [], []>} : vector<16x128xbf16>, vector<128x128xbf16>, vector<16x128xf32> -> vector<16x128xf32>
      %71 = vector.broadcast %65 : vector<16x1xf32> to vector<16x128xf32>
      %72 = vector.broadcast %10 : vector<1x128xf32> to vector<16x128xf32>
      %73 = arith.addf %71, %72 : vector<16x128xf32>
      %74 = math.log %70 : vector<16x128xf32>
      %75 = arith.addf %73, %74 : vector<16x128xf32>
      %c1_i32_35 = arith.constant 1 : i32
      %76 = arith.cmpi sge, %57, %c1_i32_35 : i32
      %77 = vector.broadcast %57 : i32 to vector<16x1xi32>
      %78 = arith.cmpi slt, %77, %9 : vector<16x1xi32>
      %79 = vector.broadcast %76 : i1 to vector<16x1xi1>
      %80 = arith.andi %79, %78 : vector<16x1xi1>
      %81 = vector.shape_cast %80 : vector<16x1xi1> to vector<16x1xi1>
      %82 = vector.broadcast %81 : vector<16x1xi1> to vector<16x128xi1>
      %83 = arith.select %82, %75, %55 : vector<16x128xi1>, vector<16x128xf32>
      %c2_i32 = arith.constant 2 : i32
      %c8_i32_36 = arith.constant 8 : i32
      %84 = arith.muli %arg1, %c8_i32_36 : i32
      %85 = arith.addi %84, %c2_i32 : i32
      %c16_i32_37 = arith.constant 16 : i32
      %86 = arith.muli %c2_i32, %c16_i32_37 : i32
      %87 = tpu.assume_multiple %86, 16 : i32
      %88 = arith.index_cast %87 : i32 to index
      %c0_38 = arith.constant 0 : index
      %89 = vector.load %arg11[%88, %c0_38] : memref<128x128xbf16, #tpu.memory_space<vmem>>, vector<16x128xbf16>
      %90 = arith.extf %89 : vector<16x128xbf16> to vector<16x128xf32>
      %91 = arith.addf %83, %90 : vector<16x128xf32>
      %cst_39 = arith.constant dense<0xFF800000> : vector<16xf32>
      %92 = vector.multi_reduction <maximumf>, %91, %cst_39 [1] : vector<16x128xf32> to vector<16xf32>
      %93 = vector.shape_cast %92 : vector<16xf32> to vector<16x1xf32>
      %94 = vector.broadcast %93 : vector<16x1xf32> to vector<16x128xf32>
      %95 = arith.subf %91, %94 : vector<16x128xf32>
      %96 = math.exp %95 : vector<16x128xf32>
      %97 = arith.truncf %96 : vector<16x128xf32> to vector<16x128xbf16>
      %cst_40 = arith.constant dense<0.000000e+00> : vector<16x128xf32>
      %98 = tpu.matmul %97, %11, %cst_40 {dimension_numbers = #tpu.dot_dimension_numbers<[1], [0], [0], [1], [0, 0, 1, 1], [], []>} : vector<16x128xbf16>, vector<128x128xbf16>, vector<16x128xf32> -> vector<16x128xf32>
      %99 = vector.broadcast %93 : vector<16x1xf32> to vector<16x128xf32>
      %100 = vector.broadcast %10 : vector<1x128xf32> to vector<16x128xf32>
      %101 = arith.addf %99, %100 : vector<16x128xf32>
      %102 = math.log %98 : vector<16x128xf32>
      %103 = arith.addf %101, %102 : vector<16x128xf32>
      %c1_i32_41 = arith.constant 1 : i32
      %104 = arith.cmpi sge, %85, %c1_i32_41 : i32
      %105 = vector.broadcast %85 : i32 to vector<16x1xi32>
      %106 = arith.cmpi slt, %105, %9 : vector<16x1xi32>
      %107 = vector.broadcast %104 : i1 to vector<16x1xi1>
      %108 = arith.andi %107, %106 : vector<16x1xi1>
      %109 = vector.shape_cast %108 : vector<16x1xi1> to vector<16x1xi1>
      %110 = vector.broadcast %109 : vector<16x1xi1> to vector<16x128xi1>
      %111 = arith.select %110, %103, %83 : vector<16x128xi1>, vector<16x128xf32>
      %c3_i32 = arith.constant 3 : i32
      %c8_i32_42 = arith.constant 8 : i32
      %112 = arith.muli %arg1, %c8_i32_42 : i32
      %113 = arith.addi %112, %c3_i32 : i32
      %c16_i32_43 = arith.constant 16 : i32
      %114 = arith.muli %c3_i32, %c16_i32_43 : i32
      %115 = tpu.assume_multiple %114, 16 : i32
      %116 = arith.index_cast %115 : i32 to index
      %c0_44 = arith.constant 0 : index
      %117 = vector.load %arg11[%116, %c0_44] : memref<128x128xbf16, #tpu.memory_space<vmem>>, vector<16x128xbf16>
      %118 = arith.extf %117 : vector<16x128xbf16> to vector<16x128xf32>
      %119 = arith.addf %111, %118 : vector<16x128xf32>
      %cst_45 = arith.constant dense<0xFF800000> : vector<16xf32>
      %120 = vector.multi_reduction <maximumf>, %119, %cst_45 [1] : vector<16x128xf32> to vector<16xf32>
      %121 = vector.shape_cast %120 : vector<16xf32> to vector<16x1xf32>
      %122 = vector.broadcast %121 : vector<16x1xf32> to vector<16x128xf32>
      %123 = arith.subf %119, %122 : vector<16x128xf32>
      %124 = math.exp %123 : vector<16x128xf32>
      %125 = arith.truncf %124 : vector<16x128xf32> to vector<16x128xbf16>
      %cst_46 = arith.constant dense<0.000000e+00> : vector<16x128xf32>
      %126 = tpu.matmul %125, %11, %cst_46 {dimension_numbers = #tpu.dot_dimension_numbers<[1], [0], [0], [1], [0, 0, 1, 1], [], []>} : vector<16x128xbf16>, vector<128x128xbf16>, vector<16x128xf32> -> vector<16x128xf32>
      %127 = vector.broadcast %121 : vector<16x1xf32> to vector<16x128xf32>
      %128 = vector.broadcast %10 : vector<1x128xf32> to vector<16x128xf32>
      %129 = arith.addf %127, %128 : vector<16x128xf32>
      %130 = math.log %126 : vector<16x128xf32>
      %131 = arith.addf %129, %130 : vector<16x128xf32>
      %c1_i32_47 = arith.constant 1 : i32
      %132 = arith.cmpi sge, %113, %c1_i32_47 : i32
      %133 = vector.broadcast %113 : i32 to vector<16x1xi32>
      %134 = arith.cmpi slt, %133, %9 : vector<16x1xi32>
      %135 = vector.broadcast %132 : i1 to vector<16x1xi1>
      %136 = arith.andi %135, %134 : vector<16x1xi1>
      %137 = vector.shape_cast %136 : vector<16x1xi1> to vector<16x1xi1>
      %138 = vector.broadcast %137 : vector<16x1xi1> to vector<16x128xi1>
      %139 = arith.select %138, %131, %111 : vector<16x128xi1>, vector<16x128xf32>
      %c4_i32 = arith.constant 4 : i32
      %c8_i32_48 = arith.constant 8 : i32
      %140 = arith.muli %arg1, %c8_i32_48 : i32
      %141 = arith.addi %140, %c4_i32 : i32
      %c16_i32_49 = arith.constant 16 : i32
      %142 = arith.muli %c4_i32, %c16_i32_49 : i32
      %143 = tpu.assume_multiple %142, 16 : i32
      %144 = arith.index_cast %143 : i32 to index
      %c0_50 = arith.constant 0 : index
      %145 = vector.load %arg11[%144, %c0_50] : memref<128x128xbf16, #tpu.memory_space<vmem>>, vector<16x128xbf16>
      %146 = arith.extf %145 : vector<16x128xbf16> to vector<16x128xf32>
      %147 = arith.addf %139, %146 : vector<16x128xf32>
      %cst_51 = arith.constant dense<0xFF800000> : vector<16xf32>
      %148 = vector.multi_reduction <maximumf>, %147, %cst_51 [1] : vector<16x128xf32> to vector<16xf32>
      %149 = vector.shape_cast %148 : vector<16xf32> to vector<16x1xf32>
      %150 = vector.broadcast %149 : vector<16x1xf32> to vector<16x128xf32>
      %151 = arith.subf %147, %150 : vector<16x128xf32>
      %152 = math.exp %151 : vector<16x128xf32>
      %153 = arith.truncf %152 : vector<16x128xf32> to vector<16x128xbf16>
      %cst_52 = arith.constant dense<0.000000e+00> : vector<16x128xf32>
      %154 = tpu.matmul %153, %11, %cst_52 {dimension_numbers = #tpu.dot_dimension_numbers<[1], [0], [0], [1], [0, 0, 1, 1], [], []>} : vector<16x128xbf16>, vector<128x128xbf16>, vector<16x128xf32> -> vector<16x128xf32>
      %155 = vector.broadcast %149 : vector<16x1xf32> to vector<16x128xf32>
      %156 = vector.broadcast %10 : vector<1x128xf32> to vector<16x128xf32>
      %157 = arith.addf %155, %156 : vector<16x128xf32>
      %158 = math.log %154 : vector<16x128xf32>
      %159 = arith.addf %157, %158 : vector<16x128xf32>
      %c1_i32_53 = arith.constant 1 : i32
      %160 = arith.cmpi sge, %141, %c1_i32_53 : i32
      %161 = vector.broadcast %141 : i32 to vector<16x1xi32>
      %162 = arith.cmpi slt, %161, %9 : vector<16x1xi32>
      %163 = vector.broadcast %160 : i1 to vector<16x1xi1>
      %164 = arith.andi %163, %162 : vector<16x1xi1>
      %165 = vector.shape_cast %164 : vector<16x1xi1> to vector<16x1xi1>
      %166 = vector.broadcast %165 : vector<16x1xi1> to vector<16x128xi1>
      %167 = arith.select %166, %159, %139 : vector<16x128xi1>, vector<16x128xf32>
      %c5_i32 = arith.constant 5 : i32
      %c8_i32_54 = arith.constant 8 : i32
      %168 = arith.muli %arg1, %c8_i32_54 : i32
      %169 = arith.addi %168, %c5_i32 : i32
      %c16_i32_55 = arith.constant 16 : i32
      %170 = arith.muli %c5_i32, %c16_i32_55 : i32
      %171 = tpu.assume_multiple %170, 16 : i32
      %172 = arith.index_cast %171 : i32 to index
      %c0_56 = arith.constant 0 : index
      %173 = vector.load %arg11[%172, %c0_56] : memref<128x128xbf16, #tpu.memory_space<vmem>>, vector<16x128xbf16>
      %174 = arith.extf %173 : vector<16x128xbf16> to vector<16x128xf32>
      %175 = arith.addf %167, %174 : vector<16x128xf32>
      %cst_57 = arith.constant dense<0xFF800000> : vector<16xf32>
      %176 = vector.multi_reduction <maximumf>, %175, %cst_57 [1] : vector<16x128xf32> to vector<16xf32>
      %177 = vector.shape_cast %176 : vector<16xf32> to vector<16x1xf32>
      %178 = vector.broadcast %177 : vector<16x1xf32> to vector<16x128xf32>
      %179 = arith.subf %175, %178 : vector<16x128xf32>
      %180 = math.exp %179 : vector<16x128xf32>
      %181 = arith.truncf %180 : vector<16x128xf32> to vector<16x128xbf16>
      %cst_58 = arith.constant dense<0.000000e+00> : vector<16x128xf32>
      %182 = tpu.matmul %181, %11, %cst_58 {dimension_numbers = #tpu.dot_dimension_numbers<[1], [0], [0], [1], [0, 0, 1, 1], [], []>} : vector<16x128xbf16>, vector<128x128xbf16>, vector<16x128xf32> -> vector<16x128xf32>
      %183 = vector.broadcast %177 : vector<16x1xf32> to vector<16x128xf32>
      %184 = vector.broadcast %10 : vector<1x128xf32> to vector<16x128xf32>
      %185 = arith.addf %183, %184 : vector<16x128xf32>
      %186 = math.log %182 : vector<16x128xf32>
      %187 = arith.addf %185, %186 : vector<16x128xf32>
      %c1_i32_59 = arith.constant 1 : i32
      %188 = arith.cmpi sge, %169, %c1_i32_59 : i32
      %189 = vector.broadcast %169 : i32 to vector<16x1xi32>
      %190 = arith.cmpi slt, %189, %9 : vector<16x1xi32>
      %191 = vector.broadcast %188 : i1 to vector<16x1xi1>
      %192 = arith.andi %191, %190 : vector<16x1xi1>
      %193 = vector.shape_cast %192 : vector<16x1xi1> to vector<16x1xi1>
      %194 = vector.broadcast %193 : vector<16x1xi1> to vector<16x128xi1>
      %195 = arith.select %194, %187, %167 : vector<16x128xi1>, vector<16x128xf32>
      %c6_i32 = arith.constant 6 : i32
      %c8_i32_60 = arith.constant 8 : i32
      %196 = arith.muli %arg1, %c8_i32_60 : i32
      %197 = arith.addi %196, %c6_i32 : i32
      %c16_i32_61 = arith.constant 16 : i32
      %198 = arith.muli %c6_i32, %c16_i32_61 : i32
      %199 = tpu.assume_multiple %198, 16 : i32
      %200 = arith.index_cast %199 : i32 to index
      %c0_62 = arith.constant 0 : index
      %201 = vector.load %arg11[%200, %c0_62] : memref<128x128xbf16, #tpu.memory_space<vmem>>, vector<16x128xbf16>
      %202 = arith.extf %201 : vector<16x128xbf16> to vector<16x128xf32>
      %203 = arith.addf %195, %202 : vector<16x128xf32>
      %cst_63 = arith.constant dense<0xFF800000> : vector<16xf32>
      %204 = vector.multi_reduction <maximumf>, %203, %cst_63 [1] : vector<16x128xf32> to vector<16xf32>
      %205 = vector.shape_cast %204 : vector<16xf32> to vector<16x1xf32>
      %206 = vector.broadcast %205 : vector<16x1xf32> to vector<16x128xf32>
      %207 = arith.subf %203, %206 : vector<16x128xf32>
      %208 = math.exp %207 : vector<16x128xf32>
      %209 = arith.truncf %208 : vector<16x128xf32> to vector<16x128xbf16>
      %cst_64 = arith.constant dense<0.000000e+00> : vector<16x128xf32>
      %210 = tpu.matmul %209, %11, %cst_64 {dimension_numbers = #tpu.dot_dimension_numbers<[1], [0], [0], [1], [0, 0, 1, 1], [], []>} : vector<16x128xbf16>, vector<128x128xbf16>, vector<16x128xf32> -> vector<16x128xf32>
      %211 = vector.broadcast %205 : vector<16x1xf32> to vector<16x128xf32>
      %212 = vector.broadcast %10 : vector<1x128xf32> to vector<16x128xf32>
      %213 = arith.addf %211, %212 : vector<16x128xf32>
      %214 = math.log %210 : vector<16x128xf32>
      %215 = arith.addf %213, %214 : vector<16x128xf32>
      %c1_i32_65 = arith.constant 1 : i32
      %216 = arith.cmpi sge, %197, %c1_i32_65 : i32
      %217 = vector.broadcast %197 : i32 to vector<16x1xi32>
      %218 = arith.cmpi slt, %217, %9 : vector<16x1xi32>
      %219 = vector.broadcast %216 : i1 to vector<16x1xi1>
      %220 = arith.andi %219, %218 : vector<16x1xi1>
      %221 = vector.shape_cast %220 : vector<16x1xi1> to vector<16x1xi1>
      %222 = vector.broadcast %221 : vector<16x1xi1> to vector<16x128xi1>
      %223 = arith.select %222, %215, %195 : vector<16x128xi1>, vector<16x128xf32>
      %c7_i32 = arith.constant 7 : i32
      %c8_i32_66 = arith.constant 8 : i32
      %224 = arith.muli %arg1, %c8_i32_66 : i32
      %225 = arith.addi %224, %c7_i32 : i32
      %c16_i32_67 = arith.constant 16 : i32
      %226 = arith.muli %c7_i32, %c16_i32_67 : i32
      %227 = tpu.assume_multiple %226, 16 : i32
      %228 = arith.index_cast %227 : i32 to index
      %c0_68 = arith.constant 0 : index
      %229 = vector.load %arg11[%228, %c0_68] : memref<128x128xbf16, #tpu.memory_space<vmem>>, vector<16x128xbf16>
      %230 = arith.extf %229 : vector<16x128xbf16> to vector<16x128xf32>
      %231 = arith.addf %223, %230 : vector<16x128xf32>
      %cst_69 = arith.constant dense<0xFF800000> : vector<16xf32>
      %232 = vector.multi_reduction <maximumf>, %231, %cst_69 [1] : vector<16x128xf32> to vector<16xf32>
      %233 = vector.shape_cast %232 : vector<16xf32> to vector<16x1xf32>
      %234 = vector.broadcast %233 : vector<16x1xf32> to vector<16x128xf32>
      %235 = arith.subf %231, %234 : vector<16x128xf32>
      %236 = math.exp %235 : vector<16x128xf32>
      %237 = arith.truncf %236 : vector<16x128xf32> to vector<16x128xbf16>
      %cst_70 = arith.constant dense<0.000000e+00> : vector<16x128xf32>
      %238 = tpu.matmul %237, %11, %cst_70 {dimension_numbers = #tpu.dot_dimension_numbers<[1], [0], [0], [1], [0, 0, 1, 1], [], []>} : vector<16x128xbf16>, vector<128x128xbf16>, vector<16x128xf32> -> vector<16x128xf32>
      %239 = vector.broadcast %233 : vector<16x1xf32> to vector<16x128xf32>
      %240 = vector.broadcast %10 : vector<1x128xf32> to vector<16x128xf32>
      %241 = arith.addf %239, %240 : vector<16x128xf32>
      %242 = math.log %238 : vector<16x128xf32>
      %243 = arith.addf %241, %242 : vector<16x128xf32>
      %c1_i32_71 = arith.constant 1 : i32
      %244 = arith.cmpi sge, %225, %c1_i32_71 : i32
      %245 = vector.broadcast %225 : i32 to vector<16x1xi32>
      %246 = arith.cmpi slt, %245, %9 : vector<16x1xi32>
      %247 = vector.broadcast %244 : i1 to vector<16x1xi1>
      %248 = arith.andi %247, %246 : vector<16x1xi1>
      %249 = vector.shape_cast %248 : vector<16x1xi1> to vector<16x1xi1>
      %250 = vector.broadcast %249 : vector<16x1xi1> to vector<16x128xi1>
      %251 = arith.select %250, %243, %223 : vector<16x128xi1>, vector<16x128xf32>
      %c8_i32_72 = arith.constant 8 : i32
      %c0_73 = arith.constant 0 : index
      %c0_74 = arith.constant 0 : index
      %252 = vector.load %arg12[%c0_73, %c0_74] : memref<16x128xf32, #tpu.memory_space<vmem>>, vector<16x128xf32>
      tpu.vector_store %arg12[%c0_73, %c0_74], %251 {strides = array<i32>} : memref<16x128xf32, #tpu.memory_space<vmem>>, vector<16x128xf32>,
    } else {
    }
    %c0_i32_20 = arith.constant 0 : i32
    %24 = arith.cmpi eq, %arg1, %c0_i32_20 : i32
    %25 = arith.extui %24 : i1 to i32
    %c0_i32_21 = arith.constant 0 : i32
    %26 = arith.cmpi ne, %25, %c0_i32_21 : i32
    scf.if %26 {
      %c0_22 = arith.constant 0 : index
      %c0_23 = arith.constant 0 : index
      %27 = vector.load %arg12[%c0_22, %c0_23] : memref<16x128xf32, #tpu.memory_space<vmem>>, vector<16x128xf32>
      %c16_i32 = arith.constant 16 : i32
      %28 = arith.muli %arg0, %c16_i32 : i32
      %29 = tpu.iota {dimensions = array<i32: 0>} : vector<16x1xi32>
      %30 = vector.broadcast %28 : i32 to vector<16x1xi32>
      %31 = arith.addi %30, %29 : vector<16x1xi32>
      %c2_i32 = arith.constant 2 : i32
      %32 = vector.broadcast %c2_i32 : i32 to vector<16x1xi32>
      %33 = arith.cmpi slt, %31, %32 : vector<16x1xi32>
      %34 = vector.extract_strided_slice %27 {offsets = [0, 5], sizes = [16, 1], strides = [1, 1]} : vector<16x128xf32> to vector<16x1xf32>
      %cst_24 = arith.constant 0.000000e+00 : f32
      %35 = vector.broadcast %cst_24 : f32 to vector<16x1xf32>
      %36 = arith.select %33, %34, %35 : vector<16x1xi1>, vector<16x1xf32>
      %37 = vector.shape_cast %36 : vector<16x1xf32> to vector<1x16x1xf32>
      %cst_25 = arith.constant dense<0.000000e+00> : vector<1xf32>
      %38 = vector.multi_reduction <add>, %37, %cst_25 [1, 2] : vector<1x16x1xf32> to vector<1xf32>
      %39 = vector.shape_cast %38 : vector<1xf32> to vector<1x1x1xf32>
      %40 = vector.extract %39[0, 0, 0] : f32 from vector<1x1x1xf32>
      %cst_26 = arith.constant 0.000000e+00 : f32
      %41 = vector.broadcast %cst_26 : f32 to vector<1x128xf32>
      %42 = vector.broadcast %40 : f32 to vector<1x128xf32>
      %43 = arith.addf %41, %42 : vector<1x128xf32>
      %c0_27 = arith.constant 0 : index
      %c0_28 = arith.constant 0 : index
      %c0_29 = arith.constant 0 : index
      %44 = vector.load %arg10[%c0_27, %c0_28, %c0_29] : memref<1x1x128xf32, #tpu.memory_space<vmem>>, vector<1x1x128xf32>
      %45 = vector.shape_cast %44 : vector<1x1x128xf32> to vector<1x128xf32>
      %46 = vector.shape_cast %43 : vector<1x128xf32> to vector<1x1x128xf32>
      tpu.vector_store %arg10[%c0_27, %c0_28, %c0_29], %46 {strides = array<i32>} : memref<1x1x128xf32, #tpu.memory_space<vmem>>, vector<1x1x128xf32>,
    } else {
    }
    return
  }
  func.func @transform_0(%arg0: i32, %arg1: i32, %arg2: memref<1xi32, #tpu.memory_space<smem>>) -> (i32, i32, i32, i32) {
    %c0_i32 = arith.constant 0 : i32
    %c0_i32_0 = arith.constant 0 : i32
    %c0_i32_1 = arith.constant 0 : i32
    return %arg1, %arg0, %c0_i32, %c0_i32_0 : i32, i32, i32, i32
  }
  func.func @transform_1(%arg0: i32, %arg1: i32, %arg2: memref<1xi32, #tpu.memory_space<smem>>) -> (i32, i32) {
    %c0_i32 = arith.constant 0 : i32
    %c0_i32_0 = arith.constant 0 : i32
    %c0_i32_1 = arith.constant 0 : i32
    return %c0_i32, %c0_i32_0 : i32, i32
  }
  func.func @transform_2(%arg0: i32, %arg1: i32, %arg2: memref<1xi32, #tpu.memory_space<smem>>) -> (i32, i32) {
    %c0_i32 = arith.constant 0 : i32
    %c0_i32_0 = arith.constant 0 : i32
    %c0_i32_1 = arith.constant 0 : i32
    return %c0_i32, %c0_i32_0 : i32, i32
  }
  func.func @transform_3(%arg0: i32, %arg1: i32, %arg2: memref<1xi32, #tpu.memory_space<smem>>) -> (i32, i32) {
    %c0_i32 = arith.constant 0 : i32
    %c0_i32_0 = arith.constant 0 : i32
    %c0_i32_1 = arith.constant 0 : i32
    return %c0_i32, %c0_i32_0 : i32, i32
  }
  func.func @transform_4(%arg0: i32, %arg1: i32, %arg2: memref<1xi32, #tpu.memory_space<smem>>) -> (i32, i32) {
    %c0_i32 = arith.constant 0 : i32
    %c0_i32_0 = arith.constant 0 : i32
    %c0_i32_1 = arith.constant 0 : i32
    return %c0_i32, %c0_i32_0 : i32, i32
  }
  func.func @transform_5(%arg0: i32, %arg1: i32, %arg2: memref<1xi32, #tpu.memory_space<smem>>) -> (i32, i32) {
    %c0_i32 = arith.constant 0 : i32
    %c0_i32_0 = arith.constant 0 : i32
    %c0_i32_1 = arith.constant 0 : i32
    return %c0_i32, %c0_i32_0 : i32, i32
  }
  func.func @transform_6(%arg0: i32, %arg1: i32, %arg2: memref<1xi32, #tpu.memory_space<smem>>) -> (i32, i32) {
    %c0_i32 = arith.constant 0 : i32
    %c0_i32_0 = arith.constant 0 : i32
    return %arg0, %c0_i32 : i32, i32
  }
  func.func @transform_7(%arg0: i32, %arg1: i32, %arg2: memref<1xi32, #tpu.memory_space<smem>>) -> (i32, i32, i32) {
    %c0_i32 = arith.constant 0 : i32
    %c0_i32_0 = arith.constant 0 : i32
    %c0_i32_1 = arith.constant 0 : i32
    return %arg0, %c0_i32, %c0_i32_0 : i32, i32, i32
  }
}

</mosaic_0001>

<llo_original>
// kernel: tpu_custom_call.1
$region0: #{tpu_custom_call.1}
  #allocation0 [shape = 'u32[]', space=smem, size = 0x4, offset = 0x4, fixed_abs, tag = 'smem constant byte address 0x4 - core index']
  #allocation1 [shape = 'u32[144,128]{1,0:T(1,128)}', space=vmem, size = 0x12000, scoped, tag = 'internal scratch']
  #allocation2 [shape = 'bf16[128,128]{1,0:T(16,128)(2,1)}', space=vmem, size = 0x8000, scoped, tag = 'scratch operand']
  #allocation3 [shape = 'f32[16,128]{1,0:T(8,128)}', space=vmem, size = 0x2000, scoped, tag = 'scratch operand']
  #allocation4 [shape = 's32[1]{0}', space=sflag, size = 0x4, scoped, tag = 'scoped memory for tpu_custom_call.1']
  #allocation5 [shape = 's32[1]{0:T(128)S(6)}', space=smem, size = 0x200, scoped, tag = 'prefetched SMEM operand 0']
  %s0 = inlined_call_operand.<no memory space> [shape: s32[1], index: 0, kind: input, shape index: {}]
  %s1 = inlined_call_operand.hbm [shape: bf16[1,1,128,128], index: 1, kind: input, shape index: {}]
  %s2 = inlined_call_operand.hbm [shape: bf16[128,128], index: 2, kind: input, shape index: {}]
  %s3 = inlined_call_operand.vmem [shape: f32[1,128], index: 3, kind: input, shape index: {}]
  %s4 = inlined_call_operand.hbm [shape: bf16[128,128], index: 4, kind: input, shape index: {}]
  %s5 = inlined_call_operand.vmem [shape: f32[1,128], index: 5, kind: input, shape index: {}]
  %s6 = inlined_call_operand.vmem [shape: f32[1,128], index: 6, kind: input, shape index: {}]
  %s7 = inlined_call_operand.vmem [shape: s32[16,1], index: 7, kind: input, shape index: {}]
  %s8 = inlined_call_operand.hbm [shape: f32[1,1,128], index: 8, kind: output, shape index: {}]
  %s9 = sld [smem:[#allocation0]]
  $region62: #{tpu_custom_call.1} parent=0
    _
  %s11 = ssub.s32 1, %s9
  %s12 = scalar_select 0, %s11, %s9
  %13 = sst [smem:[#allocation5]] %s0
  $region1: #{tpu_custom_call.1} parent=0
    #allocation6 [shape = 'u8[32768]{0}', space=vmem, size = 0x8000, scoped, tag = 'input window, operand 1, single buffered']
    #allocation7 [shape = 's32[1]{0}', space=sflag, size = 0x4, scoped, tag = 'scoped memory for tpu_custom_call.1']
    #allocation8 [shape = 's32[1]{0}', space=sflag, size = 0x4, scoped, tag = 'scoped memory for tpu_custom_call.1']
    #allocation9 [shape = 'u8[32768]{0}', space=vmem, size = 0x8000, scoped, tag = 'input window, operand 2, single buffered']
    #allocation10 [shape = 's32[1]{0}', space=sflag, size = 0x4, scoped, tag = 'scoped memory for tpu_custom_call.1']
    #allocation11 [shape = 'u8[32768]{0}', space=vmem, size = 0x8000, scoped, tag = 'input window, operand 4, single buffered']
    #allocation12 [shape = 'u8[512]{0}', space=vmem, size = 0x400, scoped, tag = 'output window, operand 0, single buffered']
    %14 = vsyncpa [#allocation7], 0
    %15 = vsyncpa [#allocation10], 0
    %16 = vsyncpa [#allocation8], 0
    // Predicated region
    $region2: #{tpu_custom_call.1} parent=1 // pred_check
      _
    $region3: #{tpu_custom_call.1} parent=1 // pred_check_branch
      %18 = sbr.rel (0) target = $region5
    $region4: #{tpu_custom_call.1} parent=1 // pred_region
      %s20 = ssub.s32 1024, 1024
      %21 = vsyncadd [#allocation7], %s20
      %s22 = sshll.u32 [#allocation6], 4
      %s23 = int_to_ptr.vmem [resolvable:$true] %s22
      %28 = dma.hbm_to_vmem [thread:$0]  %s1, 1024, %s23, [#allocation7], 64, 64, 4
    $region5: #{tpu_custom_call.1} parent=1 // pred_fallthru
      _
    // Predicated region
    $region6: #{tpu_custom_call.1} parent=1 // pred_check
      _
    $region7: #{tpu_custom_call.1} parent=1 // pred_check_branch
      %30 = sbr.rel (0) target = $region9
    $region8: #{tpu_custom_call.1} parent=1 // pred_region
      %s32 = ssub.s32 1024, 1024
      %33 = vsyncadd [#allocation10], %s32
      %s34 = sshll.u32 [#allocation9], 4
      %s35 = int_to_ptr.vmem [resolvable:$true] %s34
      %40 = dma.hbm_to_vmem [thread:$0]  %s2, 1024, %s35, [#allocation10], 64, 64, 4
    $region9: #{tpu_custom_call.1} parent=1 // pred_fallthru
      _
    // Predicated region
    $region10: #{tpu_custom_call.1} parent=1 // pred_check
      _
    $region11: #{tpu_custom_call.1} parent=1 // pred_check_branch
      %42 = sbr.rel (0) target = $region13
    $region12: #{tpu_custom_call.1} parent=1 // pred_region
      _
    $region13: #{tpu_custom_call.1} parent=1 // pred_fallthru
      _
    // Predicated region
    $region14: #{tpu_custom_call.1} parent=1 // pred_check
      _
    $region15: #{tpu_custom_call.1} parent=1 // pred_check_branch
      %44 = sbr.rel (0) target = $region17
    $region16: #{tpu_custom_call.1} parent=1 // pred_region
      %s46 = ssub.s32 1024, 1024
      %47 = vsyncadd [#allocation10], %s46
      %s48 = sshll.u32 [#allocation11], 4
      %s49 = int_to_ptr.vmem [resolvable:$true] %s48
      %54 = dma.hbm_to_vmem [thread:$0]  %s4, 1024, %s49, [#allocation10], 64, 64, 4
    $region17: #{tpu_custom_call.1} parent=1 // pred_fallthru
      _
    // Predicated region
    $region18: #{tpu_custom_call.1} parent=1 // pred_check
      _
    $region19: #{tpu_custom_call.1} parent=1 // pred_check_branch
      %56 = sbr.rel (0) target = $region21
    $region20: #{tpu_custom_call.1} parent=1 // pred_region
      _
    $region21: #{tpu_custom_call.1} parent=1 // pred_fallthru
      _
    // Predicated region
    $region22: #{tpu_custom_call.1} parent=1 // pred_check
      _
    $region23: #{tpu_custom_call.1} parent=1 // pred_check_branch
      %58 = sbr.rel (0) target = $region25
    $region24: #{tpu_custom_call.1} parent=1 // pred_region
      _
    $region25: #{tpu_custom_call.1} parent=1 // pred_fallthru
      _
    // Predicated region
    $region26: #{tpu_custom_call.1} parent=1 // pred_check
      _
    $region27: #{tpu_custom_call.1} parent=1 // pred_check_branch
      %60 = sbr.rel (0) target = $region29
    $region28: #{tpu_custom_call.1} parent=1 // pred_region
      _
    $region29: #{tpu_custom_call.1} parent=1 // pred_fallthru
      _
    // Predicated region
    $region30: #{tpu_custom_call.1} parent=1 // pred_check
      _
    $region31: #{tpu_custom_call.1} parent=1 // pred_check_branch
      %62 = sbr.rel (0) target = $region33
    $region32: #{tpu_custom_call.1} parent=1 // pred_region
      %63 = dma.done [#allocation7], 1024
    $region33: #{tpu_custom_call.1} parent=1 // pred_fallthru
      _
    // Predicated region
    $region34: #{tpu_custom_call.1} parent=1 // pred_check
      _
    $region35: #{tpu_custom_call.1} parent=1 // pred_check_branch
      %65 = sbr.rel (0) target = $region37
    $region36: #{tpu_custom_call.1} parent=1 // pred_region
      %66 = dma.done [#allocation10], 1024
    $region37: #{tpu_custom_call.1} parent=1 // pred_fallthru
      _
    // Predicated region
    $region38: #{tpu_custom_call.1} parent=1 // pred_check
      _
    $region39: #{tpu_custom_call.1} parent=1 // pred_check_branch
      %68 = sbr.rel (0) target = $region41
    $region40: #{tpu_custom_call.1} parent=1 // pred_region
      %69 = dma.done [#allocation10], 1024
    $region41: #{tpu_custom_call.1} parent=1 // pred_fallthru
      _
    %v71 = vld [vmem:[#allocation6] sm:$0xf]
    %v72 = vld [vmem:[#allocation6 + $0x4] sm:$0xf]
    %v73 = vld [vmem:[#allocation6 + $0x8] sm:$0xf]
    %v74 = vld [vmem:[#allocation6 + $0xc] sm:$0xf]
    %v75 = vld [vmem:[#allocation6 + $0x10] sm:$0xf]
    %v76 = vld [vmem:[#allocation6 + $0x14] sm:$0xf]
    %v77 = vld [vmem:[#allocation6 + $0x18] sm:$0xf]
    %v78 = vld [vmem:[#allocation6 + $0x1c] sm:$0xf]
    %v79 = vld [vmem:[#allocation6 + $0x20] sm:$0xf]
    %v80 = vld [vmem:[#allocation6 + $0x24] sm:$0xf]
    %v81 = vld [vmem:[#allocation6 + $0x28] sm:$0xf]
    %v82 = vld [vmem:[#allocation6 + $0x2c] sm:$0xf]
    %v83 = vld [vmem:[#allocation6 + $0x30] sm:$0xf]
    %v84 = vld [vmem:[#allocation6 + $0x34] sm:$0xf]
    %v85 = vld [vmem:[#allocation6 + $0x38] sm:$0xf]
    %v86 = vld [vmem:[#allocation6 + $0x3c] sm:$0xf]
    %v87 = vld [vmem:[#allocation9] sm:$0xf]
    %v88 = vld [vmem:[#allocation9 + $0x4] sm:$0xf]
    %v89 = vld [vmem:[#allocation9 + $0x8] sm:$0xf]
    %v90 = vld [vmem:[#allocation9 + $0xc] sm:$0xf]
    %v91 = vld [vmem:[#allocation9 + $0x10] sm:$0xf]
    %v92 = vld [vmem:[#allocation9 + $0x14] sm:$0xf]
    %v93 = vld [vmem:[#allocation9 + $0x18] sm:$0xf]
    %v94 = vld [vmem:[#allocation9 + $0x1c] sm:$0xf]
    %v95 = vld [vmem:[#allocation9 + $0x20] sm:$0xf]
    %v96 = vld [vmem:[#allocation9 + $0x24] sm:$0xf]
    %v97 = vld [vmem:[#allocation9 + $0x28] sm:$0xf]
    %v98 = vld [vmem:[#allocation9 + $0x2c] sm:$0xf]
    %v99 = vld [vmem:[#allocation9 + $0x30] sm:$0xf]
    %v100 = vld [vmem:[#allocation9 + $0x34] sm:$0xf]
    %v101 = vld [vmem:[#allocation9 + $0x38] sm:$0xf]
    %v102 = vld [vmem:[#allocation9 + $0x3c] sm:$0xf]
    %v103 = vld [vmem:[%s3] sm:$0x1]
    %v105 = vlaneseq
    %v106 = vshrl.u32 %v105, 7
    %v107 = vsub.s32 0, %v106
    %v108 = vrot.slane %v103, %v107
    %v126 = vunpack.c.l.b16 %v71
    %v127 = vunpack.c.l.b16 %v72
    %v128 = vunpack.c.l.b16 %v73
    %v129 = vunpack.c.l.b16 %v74
    %v130 = vunpack.c.l.b16 %v75
    %v131 = vunpack.c.l.b16 %v76
    %v132 = vunpack.c.l.b16 %v77
    %v133 = vunpack.c.l.b16 %v78
    %v134 = vunpack.c.l.b16 %v79
    %v135 = vunpack.c.l.b16 %v80
    %v136 = vunpack.c.l.b16 %v81
    %v137 = vunpack.c.l.b16 %v82
    %v138 = vunpack.c.l.b16 %v83
    %v139 = vunpack.c.l.b16 %v84
    %v140 = vunpack.c.l.b16 %v85
    %v141 = vunpack.c.l.b16 %v86
    %v142 = vpack.c.b16 %v127, %v126
    %v143 = vpack.c.b16 %v129, %v128
    %v144 = vpack.c.b16 %v131, %v130
    %v145 = vpack.c.b16 %v133, %v132
    %v146 = vpack.c.b16 %v135, %v134
    %v147 = vpack.c.b16 %v137, %v136
    %v148 = vpack.c.b16 %v139, %v138
    %v149 = vpack.c.b16 %v141, %v140
    %v174 = vunpack.c.l.b16 %v87
    %v175 = vunpack.c.l.b16 %v88
    %v176 = vunpack.c.l.b16 %v89
    %v177 = vunpack.c.l.b16 %v90
    %v178 = vunpack.c.l.b16 %v91
    %v179 = vunpack.c.l.b16 %v92
    %v180 = vunpack.c.l.b16 %v93
    %v181 = vunpack.c.l.b16 %v94
    %v182 = vunpack.c.l.b16 %v95
    %v183 = vunpack.c.l.b16 %v96
    %v184 = vunpack.c.l.b16 %v97
    %v185 = vunpack.c.l.b16 %v98
    %v186 = vunpack.c.l.b16 %v99
    %v187 = vunpack.c.l.b16 %v100
    %v188 = vunpack.c.l.b16 %v101
    %v189 = vunpack.c.l.b16 %v102
    %v190 = vpack.c.b16 %v175, %v174
    %v191 = vpack.c.b16 %v177, %v176
    %v192 = vpack.c.b16 %v179, %v178
    %v193 = vpack.c.b16 %v181, %v180
    %v194 = vpack.c.b16 %v183, %v182
    %v195 = vpack.c.b16 %v185, %v184
    %v196 = vpack.c.b16 %v187, %v186
    %v197 = vpack.c.b16 %v189, %v188
    %206 = vmatprep.subr.bf16.mxu0 0
    %207 = vmatpush1.bf16.msra.mxu0 %v190
    %208 = vmatprep.subr.bf16.mxu0 0
    %209 = vmatpush1.bf16.msra.mxu0 %v191
    %210 = vmatprep.subr.bf16.mxu0 0
    %211 = vmatpush1.bf16.msra.mxu0 %v192
    %212 = vmatprep.subr.bf16.mxu0 0
    %213 = vmatpush1.bf16.msra.mxu0 %v193
    %214 = vmatprep.subr.bf16.mxu0 0
    %215 = vmatpush1.bf16.msra.mxu0 %v194
    %216 = vmatprep.subr.bf16.mxu0 0
    %217 = vmatpush1.bf16.msra.mxu0 %v195
    %218 = vmatprep.subr.bf16.mxu0 0
    %219 = vmatpush1.bf16.msra.mxu0 %v196
    %220 = vmatprep.subr.bf16.mxu0 0
    %221 = vmatpush1.bf16.msra.mxu0 %v197
    %222 = vmatprep.subr.bf16.mxu0 0
    %223 = vmatpush1.bf16.msra.mxu0 0
    %224 = vmatprep.subr.bf16.mxu0 0
    %225 = vmatpush1.bf16.msra.mxu0 0
    %226 = vmatprep.subr.bf16.mxu0 0
    %227 = vmatpush1.bf16.msra.mxu0 0
    %228 = vmatprep.subr.bf16.mxu0 0
    %229 = vmatpush1.bf16.msra.mxu0 0
    %230 = vmatprep.subr.bf16.mxu0 0
    %231 = vmatpush1.bf16.msra.mxu0 0
    %232 = vmatprep.subr.bf16.mxu0 0
    %233 = vmatpush1.bf16.msra.mxu0 0
    %234 = vmatprep.subr.bf16.mxu0 0
    %235 = vmatpush1.bf16.msra.mxu0 0
    %236 = vmatprep.subr.bf16.mxu0 0
    %237 = vmatpush1.bf16.msra.mxu0 0
    %238 = vmatprep.mubr.bf16.mxu0 0
    %239 = vmatmul.mubr.bf16.gmra.mrb[0].mxu0 %v142
    %v240 = vpop.f32.mrb[0].mxu0
    %v241 = vadd.f32 %v108, %v240
    %v242 = vpop.f32.mrb[0].mxu0
    %v243 = vpop.f32.mrb[0].mxu0
    %v244 = vadd.f32 %v108, %v243
    %v245 = vpop.f32.mrb[0].mxu0
    %246 = vmatprep.mubr.bf16.mxu0 0
    %247 = vmatmul.mubr.bf16.gmra.mrb[0].mxu0 %v143
    %v248 = vpop.f32.mrb[0].mxu0
    %v249 = vadd.f32 %v108, %v248
    %v250 = vpop.f32.mrb[0].mxu0
    %v251 = vpop.f32.mrb[0].mxu0
    %v252 = vadd.f32 %v108, %v251
    %v253 = vpop.f32.mrb[0].mxu0
    %254 = vmatprep.mubr.bf16.mxu0 0
    %255 = vmatmul.mubr.bf16.gmra.mrb[0].mxu0 %v144
    %v256 = vpop.f32.mrb[0].mxu0
    %v257 = vadd.f32 %v108, %v256
    %v258 = vpop.f32.mrb[0].mxu0
    %v259 = vpop.f32.mrb[0].mxu0
    %v260 = vadd.f32 %v108, %v259
    %v261 = vpop.f32.mrb[0].mxu0
    %262 = vmatprep.mubr.bf16.mxu0 0
    %263 = vmatmul.mubr.bf16.gmra.mrb[0].mxu0 %v145
    %v264 = vpop.f32.mrb[0].mxu0
    %v265 = vadd.f32 %v108, %v264
    %v266 = vpop.f32.mrb[0].mxu0
    %v267 = vpop.f32.mrb[0].mxu0
    %v268 = vadd.f32 %v108, %v267
    %v269 = vpop.f32.mrb[0].mxu0
    %270 = vmatprep.mubr.bf16.mxu0 0
    %271 = vmatmul.mubr.bf16.gmra.mrb[0].mxu0 %v146
    %v272 = vpop.f32.mrb[0].mxu0
    %v273 = vadd.f32 %v108, %v272
    %v274 = vpop.f32.mrb[0].mxu0
    %v275 = vpop.f32.mrb[0].mxu0
    %v276 = vadd.f32 %v108, %v275
    %v277 = vpop.f32.mrb[0].mxu0
    %278 = vmatprep.mubr.bf16.mxu0 0
    %279 = vmatmul.mubr.bf16.gmra.mrb[0].mxu0 %v147
    %v280 = vpop.f32.mrb[0].mxu0
    %v281 = vadd.f32 %v108, %v280
    %v282 = vpop.f32.mrb[0].mxu0
    %v283 = vpop.f32.mrb[0].mxu0
    %v284 = vadd.f32 %v108, %v283
    %v285 = vpop.f32.mrb[0].mxu0
    %286 = vmatprep.mubr.bf16.mxu0 0
    %287 = vmatmul.mubr.bf16.gmra.mrb[0].mxu0 %v148
    %v288 = vpop.f32.mrb[0].mxu0
    %v289 = vadd.f32 %v108, %v288
    %v290 = vpop.f32.mrb[0].mxu0
    %v291 = vpop.f32.mrb[0].mxu0
    %v292 = vadd.f32 %v108, %v291
    %v293 = vpop.f32.mrb[0].mxu0
    %294 = vmatprep.mubr.bf16.mxu0 0
    %295 = vmatmul.mubr.bf16.gmra.mrb[0].mxu0 %v149
    %v296 = vpop.f32.mrb[0].mxu0
    %v297 = vadd.f32 %v108, %v296
    %v298 = vpop.f32.mrb[0].mxu0
    %v299 = vpop.f32.mrb[0].mxu0
    %v300 = vadd.f32 %v108, %v299
    %v301 = vpop.f32.mrb[0].mxu0
    %302 = vdwg.mxu0
    %v303 = vpack.c.bf16 %v244, %v241
    %v304 = vpack.c.bf16 %v252, %v249
    %v305 = vpack.c.bf16 %v260, %v257
    %v306 = vpack.c.bf16 %v268, %v265
    %v307 = vpack.c.bf16 %v276, %v273
    %v308 = vpack.c.bf16 %v284, %v281
    %v309 = vpack.c.bf16 %v292, %v289
    %v310 = vpack.c.bf16 %v300, %v297
    %311 = vst [vmem:[#allocation2] sm:$0xff] %v303
    %312 = vst [vmem:[#allocation2 + $0x8] sm:$0xff] %v304
    %313 = vst [vmem:[#allocation2 + $0x10] sm:$0xff] %v305
    %314 = vst [vmem:[#allocation2 + $0x18] sm:$0xff] %v306
    %315 = vst [vmem:[#allocation2 + $0x20] sm:$0xff] %v307
    %316 = vst [vmem:[#allocation2 + $0x28] sm:$0xff] %v308
    %317 = vst [vmem:[#allocation2 + $0x30] sm:$0xff] %v309
    %318 = vst [vmem:[#allocation2 + $0x38] sm:$0xff] %v310
    %v319 = vld [vmem:[%s7] sm:$0xff]
    %v320 = vld [vmem:[%s7 + $0x8] sm:$0xff]
    %v321 = vld [vmem:[%s5] sm:$0x1]
    %v322 = vld [vmem:[#allocation11] sm:$0xf]
    %v323 = vld [vmem:[#allocation11 + $0x4] sm:$0xf]
    %v324 = vld [vmem:[#allocation11 + $0x8] sm:$0xf]
    %v325 = vld [vmem:[#allocation11 + $0xc] sm:$0xf]
    %v326 = vld [vmem:[#allocation11 + $0x10] sm:$0xf]
    %v327 = vld [vmem:[#allocation11 + $0x14] sm:$0xf]
    %v328 = vld [vmem:[#allocation11 + $0x18] sm:$0xf]
    %v329 = vld [vmem:[#allocation11 + $0x1c] sm:$0xf]
    %v330 = vld [vmem:[#allocation11 + $0x20] sm:$0xf]
    %v331 = vld [vmem:[#allocation11 + $0x24] sm:$0xf]
    %v332 = vld [vmem:[#allocation11 + $0x28] sm:$0xf]
    %v333 = vld [vmem:[#allocation11 + $0x2c] sm:$0xf]
    %v334 = vld [vmem:[#allocation11 + $0x30] sm:$0xf]
    %v335 = vld [vmem:[#allocation11 + $0x34] sm:$0xf]
    %v336 = vld [vmem:[#allocation11 + $0x38] sm:$0xf]
    %v337 = vld [vmem:[#allocation11 + $0x3c] sm:$0xf]
    %p338 = scmp.eq.s32.totalorder 0, 0
    // Predicated region
    $region42: #{tpu_custom_call.1} parent=1 // pred_check
      %p339 = pneg %p338
    $region43: #{tpu_custom_call.1} parent=1 // pred_check_branch
      %341 = sbr.rel (%p339) target = $region45
    $region44: #{tpu_custom_call.1} parent=1 // pred_region
      %v342 = vld [vmem:[%s6] sm:$0x1]
      %344 = vset.pattern.permute.xlu0 4
      %345 = vperm.xlu0 %344, %v241
      %v346 = vpop.permute.xlu0 %345
      %349 = vset.pattern.permute.xlu0 4
      %350 = vperm.xlu0 %349, %v244
      %v351 = vpop.permute.xlu0 %350
      %v354 = vlaneseq
      %v355 = vshrl.u32 %v354, 7
      %v356 = vsub.s32 0, %v355
      %v357 = vrot.slane %v342, %v356
      %v359 = vadd.f32 %v346, %v357
      %v360 = vadd.f32 %v351, %v357
      %361 = vst [vmem:[#allocation3] sm:$0xff] %v359
      %362 = vst [vmem:[#allocation3 + $0x8] sm:$0xff] %v360
    $region45: #{tpu_custom_call.1} parent=1 // pred_fallthru
      _
    %s363 = sld [smem:[#allocation5]]
    %s364 = smul.u32 0, 8
    %s365 = ssub.s32 %s363, %s364
    %p366 = scmp.gt.s32.totalorder %s365, 0
    %s367 = scalar_select %p366, %s365, 0
    %p368 = scmp.lt.s32.totalorder %s367, 8
    %s369 = scalar_select %p368, %s367, 8
    %p370 = scmp.gt.s32.totalorder %s369, 0
    // Predicated region
    $region46: #{tpu_custom_call.1} parent=1 // pred_check
      %p371 = pneg %p370
    $region47: #{tpu_custom_call.1} parent=1 // pred_check_branch
      %373 = sbr.rel (%p371) target = $region49
    $region48: #{tpu_custom_call.1} parent=1 // pred_region
      %v374 = vld [vmem:[#allocation3] sm:$0xff]
      %v375 = vld [vmem:[#allocation3 + $0x8] sm:$0xff]
      %v376 = vld [vmem:[#allocation2] sm:$0xff]
      %v377 = vunpack.c.l.bf16 %v376
      %v378 = vunpack.c.h.bf16 %v376
      %v379 = vadd.f32 %v374, %v377
      %v380 = vadd.f32 %v375, %v378
      %381 = vmax.xlane.f32.xlu0 %v379
      %v382 = vpop.xlane.xlu0 %381
      %383 = vmax.xlane.f32.xlu0 %v380
      %v384 = vpop.xlane.xlu0 %383
      %v385 = vsub.f32 %v379, %v382
      %v386 = vsub.f32 %v380, %v384
      %v387 = vmul.f32 %v385, 1.442695
      %v388 = vpow.pop %v387
      %v389 = vmul.f32 %v386, 1.442695
      %v390 = vpow.pop %v389
      %v391 = vpack.c.bf16 %v390, %v388
      %v408 = vunpack.c.l.b16 %v322
      %v409 = vunpack.c.l.b16 %v323
      %v410 = vunpack.c.l.b16 %v324
      %v411 = vunpack.c.l.b16 %v325
      %v412 = vunpack.c.l.b16 %v326
      %v413 = vunpack.c.l.b16 %v327
      %v414 = vunpack.c.l.b16 %v328
      %v415 = vunpack.c.l.b16 %v329
      %v416 = vunpack.c.l.b16 %v330
      %v417 = vunpack.c.l.b16 %v331
      %v418 = vunpack.c.l.b16 %v332
      %v419 = vunpack.c.l.b16 %v333
      %v420 = vunpack.c.l.b16 %v334
      %v421 = vunpack.c.l.b16 %v335
      %v422 = vunpack.c.l.b16 %v336
      %v423 = vunpack.c.l.b16 %v337
      %v424 = vpack.c.b16 %v409, %v408
      %v425 = vpack.c.b16 %v411, %v410
      %v426 = vpack.c.b16 %v413, %v412
      %v427 = vpack.c.b16 %v415, %v414
      %v428 = vpack.c.b16 %v417, %v416
      %v429 = vpack.c.b16 %v419, %v418
      %v430 = vpack.c.b16 %v421, %v420
      %v431 = vpack.c.b16 %v423, %v422
      %440 = vmatprep.subr.bf16.mxu0 0
      %441 = vmatpush1.bf16.msra.mxu0 %v424
      %442 = vmatprep.subr.bf16.mxu0 0
      %443 = vmatpush1.bf16.msra.mxu0 %v425
      %444 = vmatprep.subr.bf16.mxu0 0
      %445 = vmatpush1.bf16.msra.mxu0 %v426
      %446 = vmatprep.subr.bf16.mxu0 0
      %447 = vmatpush1.bf16.msra.mxu0 %v427
      %448 = vmatprep.subr.bf16.mxu0 0
      %449 = vmatpush1.bf16.msra.mxu0 %v428
      %450 = vmatprep.subr.bf16.mxu0 0
      %451 = vmatpush1.bf16.msra.mxu0 %v429
      %452 = vmatprep.subr.bf16.mxu0 0
      %453 = vmatpush1.bf16.msra.mxu0 %v430
      %454 = vmatprep.subr.bf16.mxu0 0
      %455 = vmatpush1.bf16.msra.mxu0 %v431
      %456 = vmatprep.subr.bf16.mxu0 0
      %457 = vmatpush1.bf16.msra.mxu0 0
      %458 = vmatprep.subr.bf16.mxu0 0
      %459 = vmatpush1.bf16.msra.mxu0 0
      %460 = vmatprep.subr.bf16.mxu0 0
      %461 = vmatpush1.bf16.msra.mxu0 0
      %462 = vmatprep.subr.bf16.mxu0 0
      %463 = vmatpush1.bf16.msra.mxu0 0
      %464 = vmatprep.subr.bf16.mxu0 0
      %465 = vmatpush1.bf16.msra.mxu0 0
      %466 = vmatprep.subr.bf16.mxu0 0
      %467 = vmatpush1.bf16.msra.mxu0 0
      %468 = vmatprep.subr.bf16.mxu0 0
      %469 = vmatpush1.bf16.msra.mxu0 0
      %470 = vmatprep.subr.bf16.mxu0 0
      %471 = vmatpush1.bf16.msra.mxu0 0
      %472 = vmatprep.mubr.bf16.mxu0 0
      %473 = vmatmul.mubr.bf16.gmra.mrb[0].mxu0 %v391
      %v474 = vpop.f32.mrb[0].mxu0
      %v475 = vadd.f32 0.0, %v474
      %v476 = vpop.f32.mrb[0].mxu0
      %v477 = vpop.f32.mrb[0].mxu0
      %v478 = vadd.f32 0.0, %v477
      %v479 = vpop.f32.mrb[0].mxu0
      %480 = vdwg.mxu0
      %v482 = vlaneseq
      %v483 = vshrl.u32 %v482, 7
      %v484 = vsub.s32 0, %v483
      %v485 = vrot.slane %v321, %v484
      %v487 = vadd.f32 %v382, %v485
      %v488 = vadd.f32 %v384, %v485
      %v489 = vlog2.pop %v475
      %v490 = vmul.f32 %v489, 0.6931472
      %v491 = vlog2.pop %v478
      %v492 = vmul.f32 %v491, 0.6931472
      %v493 = vadd.f32 %v487, %v490
      %v494 = vadd.f32 %v488, %v492
      %p495 = scmp.ge.s32.totalorder %s364, 1
      %v496 = vstv %s364
      %vm497 = vcmp.lt.s32.totalorder %v496, %v319
      %vm498 = vcmp.lt.s32.totalorder %v496, %v320
      %s499 = scalar_select %p495, 1, 0
      %v500 = vstv %s499
      %vm501 = vcmp.eq.s32.totalorder %v500, 1
      %vm502 = vmand %vm501, %vm497
      %vm503 = vmand %vm501, %vm498
      %v504 = vsel %vm502, 1, 0
      %v505 = vsel %vm503, 1, 0
      %506 = vset.pattern.permute.xlu0 0
      %507 = vperm.xlu0 %506, %v504
      %v508 = vpop.permute.xlu0 %507
      %509 = vset.pattern.permute.xlu0 0
      %510 = vperm.xlu0 %509, %v505
      %v511 = vpop.permute.xlu0 %510
      %vm512 = vcmp.eq.s32.totalorder %v508, 1
      %vm513 = vcmp.eq.s32.totalorder %v511, 1
      %v514 = vsel %vm512, %v493, %v374
      %v515 = vsel %vm513, %v494, %v375
      %s516 = sadd.s32 %s364, 1
      %s517 = scalar_lea.vmem [#allocation2], 8
      %v518 = vld [vmem:[%s517] sm:$0xff]
      %v519 = vunpack.c.l.bf16 %v518
      %v520 = vunpack.c.h.bf16 %v518
      %v521 = vadd.f32 %v514, %v519
      %v522 = vadd.f32 %v515, %v520
      %523 = vmax.xlane.f32.xlu0 %v521
      %v524 = vpop.xlane.xlu0 %523
      %525 = vmax.xlane.f32.xlu0 %v522
      %v526 = vpop.xlane.xlu0 %525
      %v527 = vsub.f32 %v521, %v524
      %v528 = vsub.f32 %v522, %v526
      %v529 = vmul.f32 %v527, 1.442695
      %v530 = vpow.pop %v529
      %v531 = vmul.f32 %v528, 1.442695
      %v532 = vpow.pop %v531
      %v533 = vpack.c.bf16 %v532, %v530
      %534 = vmatprep.subr.bf16.mxu0 0
      %535 = vmatpush1.bf16.msra.mxu0 %v424
      %536 = vmatprep.subr.bf16.mxu0 0
      %537 = vmatpush1.bf16.msra.mxu0 %v425
      %538 = vmatprep.subr.bf16.mxu0 0
      %539 = vmatpush1.bf16.msra.mxu0 %v426
      %540 = vmatprep.subr.bf16.mxu0 0
      %541 = vmatpush1.bf16.msra.mxu0 %v427
      %542 = vmatprep.subr.bf16.mxu0 0
      %543 = vmatpush1.bf16.msra.mxu0 %v428
      %544 = vmatprep.subr.bf16.mxu0 0
      %545 = vmatpush1.bf16.msra.mxu0 %v429
      %546 = vmatprep.subr.bf16.mxu0 0
      %547 = vmatpush1.bf16.msra.mxu0 %v430
      %548 = vmatprep.subr.bf16.mxu0 0
      %549 = vmatpush1.bf16.msra.mxu0 %v431
      %550 = vmatprep.subr.bf16.mxu0 0
      %551 = vmatpush1.bf16.msra.mxu0 0
      %552 = vmatprep.subr.bf16.mxu0 0
      %553 = vmatpush1.bf16.msra.mxu0 0
      %554 = vmatprep.subr.bf16.mxu0 0
      %555 = vmatpush1.bf16.msra.mxu0 0
      %556 = vmatprep.subr.bf16.mxu0 0
      %557 = vmatpush1.bf16.msra.mxu0 0
      %558 = vmatprep.subr.bf16.mxu0 0
      %559 = vmatpush1.bf16.msra.mxu0 0
      %560 = vmatprep.subr.bf16.mxu0 0
      %561 = vmatpush1.bf16.msra.mxu0 0
      %562 = vmatprep.subr.bf16.mxu0 0
      %563 = vmatpush1.bf16.msra.mxu0 0
      %564 = vmatprep.subr.bf16.mxu0 0
      %565 = vmatpush1.bf16.msra.mxu0 0
      %566 = vmatprep.mubr.bf16.mxu0 0
      %567 = vmatmul.mubr.bf16.gmra.mrb[0].mxu0 %v533
      %v568 = vpop.f32.mrb[0].mxu0
      %v569 = vadd.f32 0.0, %v568
      %v570 = vpop.f32.mrb[0].mxu0
      %v571 = vpop.f32.mrb[0].mxu0
      %v572 = vadd.f32 0.0, %v571
      %v573 = vpop.f32.mrb[0].mxu0
      %574 = vdwg.mxu0
      %v575 = vadd.f32 %v524, %v485
      %v576 = vadd.f32 %v526, %v485
      %v577 = vlog2.pop %v569
      %v578 = vmul.f32 %v577, 0.6931472
      %v579 = vlog2.pop %v572
      %v580 = vmul.f32 %v579, 0.6931472
      %v581 = vadd.f32 %v575, %v578
      %v582 = vadd.f32 %v576, %v580
      %p583 = scmp.ge.s32.totalorder %s516, 1
      %v584 = vstv %s516
      %vm585 = vcmp.lt.s32.totalorder %v584, %v319
      %vm586 = vcmp.lt.s32.totalorder %v584, %v320
      %s587 = scalar_select %p583, 1, 0
      %v588 = vstv %s587
      %vm589 = vcmp.eq.s32.totalorder %v588, 1
      %vm590 = vmand %vm589, %vm585
      %vm591 = vmand %vm589, %vm586
      %v592 = vsel %vm590, 1, 0
      %v593 = vsel %vm591, 1, 0
      %594 = vset.pattern.permute.xlu0 0
      %595 = vperm.xlu0 %594, %v592
      %v596 = vpop.permute.xlu0 %595
      %597 = vset.pattern.permute.xlu0 0
      %598 = vperm.xlu0 %597, %v593
      %v599 = vpop.permute.xlu0 %598
      %vm600 = vcmp.eq.s32.totalorder %v596, 1
      %vm601 = vcmp.eq.s32.totalorder %v599, 1
      %v602 = vsel %vm600, %v581, %v514
      %v603 = vsel %vm601, %v582, %v515
      %s604 = sadd.s32 %s364, 2
      %s605 = scalar_lea.vmem [#allocation2], 16
      %v606 = vld [vmem:[%s605] sm:$0xff]
      %v607 = vunpack.c.l.bf16 %v606
      %v608 = vunpack.c.h.bf16 %v606
      %v609 = vadd.f32 %v602, %v607
      %v610 = vadd.f32 %v603, %v608
      %611 = vmax.xlane.f32.xlu0 %v609
      %v612 = vpop.xlane.xlu0 %611
      %613 = vmax.xlane.f32.xlu0 %v610
      %v614 = vpop.xlane.xlu0 %613
      %v615 = vsub.f32 %v609, %v612
      %v616 = vsub.f32 %v610, %v614
      %v617 = vmul.f32 %v615, 1.442695
      %v618 = vpow.pop %v617
      %v619 = vmul.f32 %v616, 1.442695
      %v620 = vpow.pop %v619
      %v621 = vpack.c.bf16 %v620, %v618
      %622 = vmatprep.subr.bf16.mxu0 0
      %623 = vmatpush1.bf16.msra.mxu0 %v424
      %624 = vmatprep.subr.bf16.mxu0 0
      %625 = vmatpush1.bf16.msra.mxu0 %v425
      %626 = vmatprep.subr.bf16.mxu0 0
      %627 = vmatpush1.bf16.msra.mxu0 %v426
      %628 = vmatprep.subr.bf16.mxu0 0
      %629 = vmatpush1.bf16.msra.mxu0 %v427
      %630 = vmatprep.subr.bf16.mxu0 0
      %631 = vmatpush1.bf16.msra.mxu0 %v428
      %632 = vmatprep.subr.bf16.mxu0 0
      %633 = vmatpush1.bf16.msra.mxu0 %v429
      %634 = vmatprep.subr.bf16.mxu0 0
      %635 = vmatpush1.bf16.msra.mxu0 %v430
      %636 = vmatprep.subr.bf16.mxu0 0
      %637 = vmatpush1.bf16.msra.mxu0 %v431
      %638 = vmatprep.subr.bf16.mxu0 0
      %639 = vmatpush1.bf16.msra.mxu0 0
      %640 = vmatprep.subr.bf16.mxu0 0
      %641 = vmatpush1.bf16.msra.mxu0 0
      %642 = vmatprep.subr.bf16.mxu0 0
      %643 = vmatpush1.bf16.msra.mxu0 0
      %644 = vmatprep.subr.bf16.mxu0 0
      %645 = vmatpush1.bf16.msra.mxu0 0
      %646 = vmatprep.subr.bf16.mxu0 0
      %647 = vmatpush1.bf16.msra.mxu0 0
      %648 = vmatprep.subr.bf16.mxu0 0
      %649 = vmatpush1.bf16.msra.mxu0 0
      %650 = vmatprep.subr.bf16.mxu0 0
      %651 = vmatpush1.bf16.msra.mxu0 0
      %652 = vmatprep.subr.bf16.mxu0 0
      %653 = vmatpush1.bf16.msra.mxu0 0
      %654 = vmatprep.mubr.bf16.mxu0 0
      %655 = vmatmul.mubr.bf16.gmra.mrb[0].mxu0 %v621
      %v656 = vpop.f32.mrb[0].mxu0
      %v657 = vadd.f32 0.0, %v656
      %v658 = vpop.f32.mrb[0].mxu0
      %v659 = vpop.f32.mrb[0].mxu0
      %v660 = vadd.f32 0.0, %v659
      %v661 = vpop.f32.mrb[0].mxu0
      %662 = vdwg.mxu0
      %v663 = vadd.f32 %v612, %v485
      %v664 = vadd.f32 %v614, %v485
      %v665 = vlog2.pop %v657
      %v666 = vmul.f32 %v665, 0.6931472
      %v667 = vlog2.pop %v660
      %v668 = vmul.f32 %v667, 0.6931472
      %v669 = vadd.f32 %v663, %v666
      %v670 = vadd.f32 %v664, %v668
      %p671 = scmp.ge.s32.totalorder %s604, 1
      %v672 = vstv %s604
      %vm673 = vcmp.lt.s32.totalorder %v672, %v319
      %vm674 = vcmp.lt.s32.totalorder %v672, %v320
      %s675 = scalar_select %p671, 1, 0
      %v676 = vstv %s675
      %vm677 = vcmp.eq.s32.totalorder %v676, 1
      %vm678 = vmand %vm677, %vm673
      %vm679 = vmand %vm677, %vm674
      %v680 = vsel %vm678, 1, 0
      %v681 = vsel %vm679, 1, 0
      %682 = vset.pattern.permute.xlu0 0
      %683 = vperm.xlu0 %682, %v680
      %v684 = vpop.permute.xlu0 %683
      %685 = vset.pattern.permute.xlu0 0
      %686 = vperm.xlu0 %685, %v681
      %v687 = vpop.permute.xlu0 %686
      %vm688 = vcmp.eq.s32.totalorder %v684, 1
      %vm689 = vcmp.eq.s32.totalorder %v687, 1
      %v690 = vsel %vm688, %v669, %v602
      %v691 = vsel %vm689, %v670, %v603
      %s692 = sadd.s32 %s364, 3
      %s693 = scalar_lea.vmem [#allocation2], 24
      %v694 = vld [vmem:[%s693] sm:$0xff]
      %v695 = vunpack.c.l.bf16 %v694
      %v696 = vunpack.c.h.bf16 %v694
      %v697 = vadd.f32 %v690, %v695
      %v698 = vadd.f32 %v691, %v696
      %699 = vmax.xlane.f32.xlu0 %v697
      %v700 = vpop.xlane.xlu0 %699
      %701 = vmax.xlane.f32.xlu0 %v698
      %v702 = vpop.xlane.xlu0 %701
      %v703 = vsub.f32 %v697, %v700
      %v704 = vsub.f32 %v698, %v702
      %v705 = vmul.f32 %v703, 1.442695
      %v706 = vpow.pop %v705
      %v707 = vmul.f32 %v704, 1.442695
      %v708 = vpow.pop %v707
      %v709 = vpack.c.bf16 %v708, %v706
      %710 = vmatprep.subr.bf16.mxu0 0
      %711 = vmatpush1.bf16.msra.mxu0 %v424
      %712 = vmatprep.subr.bf16.mxu0 0
      %713 = vmatpush1.bf16.msra.mxu0 %v425
      %714 = vmatprep.subr.bf16.mxu0 0
      %715 = vmatpush1.bf16.msra.mxu0 %v426
      %716 = vmatprep.subr.bf16.mxu0 0
      %717 = vmatpush1.bf16.msra.mxu0 %v427
      %718 = vmatprep.subr.bf16.mxu0 0
      %719 = vmatpush1.bf16.msra.mxu0 %v428
      %720 = vmatprep.subr.bf16.mxu0 0
      %721 = vmatpush1.bf16.msra.mxu0 %v429
      %722 = vmatprep.subr.bf16.mxu0 0
      %723 = vmatpush1.bf16.msra.mxu0 %v430
      %724 = vmatprep.subr.bf16.mxu0 0
      %725 = vmatpush1.bf16.msra.mxu0 %v431
      %726 = vmatprep.subr.bf16.mxu0 0
      %727 = vmatpush1.bf16.msra.mxu0 0
      %728 = vmatprep.subr.bf16.mxu0 0
      %729 = vmatpush1.bf16.msra.mxu0 0
      %730 = vmatprep.subr.bf16.mxu0 0
      %731 = vmatpush1.bf16.msra.mxu0 0
      %732 = vmatprep.subr.bf16.mxu0 0
      %733 = vmatpush1.bf16.msra.mxu0 0
      %734 = vmatprep.subr.bf16.mxu0 0
      %735 = vmatpush1.bf16.msra.mxu0 0
      %736 = vmatprep.subr.bf16.mxu0 0
      %737 = vmatpush1.bf16.msra.mxu0 0
      %738 = vmatprep.subr.bf16.mxu0 0
      %739 = vmatpush1.bf16.msra.mxu0 0
      %740 = vmatprep.subr.bf16.mxu0 0
      %741 = vmatpush1.bf16.msra.mxu0 0
      %742 = vmatprep.mubr.bf16.mxu0 0
      %743 = vmatmul.mubr.bf16.gmra.mrb[0].mxu0 %v709
      %v744 = vpop.f32.mrb[0].mxu0
      %v745 = vadd.f32 0.0, %v744
      %v746 = vpop.f32.mrb[0].mxu0
      %v747 = vpop.f32.mrb[0].mxu0
      %v748 = vadd.f32 0.0, %v747
      %v749 = vpop.f32.mrb[0].mxu0
      %750 = vdwg.mxu0
      %v751 = vadd.f32 %v700, %v485
      %v752 = vadd.f32 %v702, %v485
      %v753 = vlog2.pop %v745
      %v754 = vmul.f32 %v753, 0.6931472
      %v755 = vlog2.pop %v748
      %v756 = vmul.f32 %v755, 0.6931472
      %v757 = vadd.f32 %v751, %v754
      %v758 = vadd.f32 %v752, %v756
      %p759 = scmp.ge.s32.totalorder %s692, 1
      %v760 = vstv %s692
      %vm761 = vcmp.lt.s32.totalorder %v760, %v319
      %vm762 = vcmp.lt.s32.totalorder %v760, %v320
      %s763 = scalar_select %p759, 1, 0
      %v764 = vstv %s763
      %vm765 = vcmp.eq.s32.totalorder %v764, 1
      %vm766 = vmand %vm765, %vm761
      %vm767 = vmand %vm765, %vm762
      %v768 = vsel %vm766, 1, 0
      %v769 = vsel %vm767, 1, 0
      %770 = vset.pattern.permute.xlu0 0
      %771 = vperm.xlu0 %770, %v768
      %v772 = vpop.permute.xlu0 %771
      %773 = vset.pattern.permute.xlu0 0
      %774 = vperm.xlu0 %773, %v769
      %v775 = vpop.permute.xlu0 %774
      %vm776 = vcmp.eq.s32.totalorder %v772, 1
      %vm777 = vcmp.eq.s32.totalorder %v775, 1
      %v778 = vsel %vm776, %v757, %v690
      %v779 = vsel %vm777, %v758, %v691
      %s780 = sadd.s32 %s364, 4
      %s781 = scalar_lea.vmem [#allocation2], 32
      %v782 = vld [vmem:[%s781] sm:$0xff]
      %v783 = vunpack.c.l.bf16 %v782
      %v784 = vunpack.c.h.bf16 %v782
      %v785 = vadd.f32 %v778, %v783
      %v786 = vadd.f32 %v779, %v784
      %787 = vmax.xlane.f32.xlu0 %v785
      %v788 = vpop.xlane.xlu0 %787
      %789 = vmax.xlane.f32.xlu0 %v786
      %v790 = vpop.xlane.xlu0 %789
      %v791 = vsub.f32 %v785, %v788
      %v792 = vsub.f32 %v786, %v790
      %v793 = vmul.f32 %v791, 1.442695
      %v794 = vpow.pop %v793
      %v795 = vmul.f32 %v792, 1.442695
      %v796 = vpow.pop %v795
      %v797 = vpack.c.bf16 %v796, %v794
      %798 = vmatprep.subr.bf16.mxu0 0
      %799 = vmatpush1.bf16.msra.mxu0 %v424
      %800 = vmatprep.subr.bf16.mxu0 0
      %801 = vmatpush1.bf16.msra.mxu0 %v425
      %802 = vmatprep.subr.bf16.mxu0 0
      %803 = vmatpush1.bf16.msra.mxu0 %v426
      %804 = vmatprep.subr.bf16.mxu0 0
      %805 = vmatpush1.bf16.msra.mxu0 %v427
      %806 = vmatprep.subr.bf16.mxu0 0
      %807 = vmatpush1.bf16.msra.mxu0 %v428
      %808 = vmatprep.subr.bf16.mxu0 0
      %809 = vmatpush1.bf16.msra.mxu0 %v429
      %810 = vmatprep.subr.bf16.mxu0 0
      %811 = vmatpush1.bf16.msra.mxu0 %v430
      %812 = vmatprep.subr.bf16.mxu0 0
      %813 = vmatpush1.bf16.msra.mxu0 %v431
      %814 = vmatprep.subr.bf16.mxu0 0
      %815 = vmatpush1.bf16.msra.mxu0 0
      %816 = vmatprep.subr.bf16.mxu0 0
      %817 = vmatpush1.bf16.msra.mxu0 0
      %818 = vmatprep.subr.bf16.mxu0 0
      %819 = vmatpush1.bf16.msra.mxu0 0
      %820 = vmatprep.subr.bf16.mxu0 0
      %821 = vmatpush1.bf16.msra.mxu0 0
      %822 = vmatprep.subr.bf16.mxu0 0
      %823 = vmatpush1.bf16.msra.mxu0 0
      %824 = vmatprep.subr.bf16.mxu0 0
      %825 = vmatpush1.bf16.msra.mxu0 0
      %826 = vmatprep.subr.bf16.mxu0 0
      %827 = vmatpush1.bf16.msra.mxu0 0
      %828 = vmatprep.subr.bf16.mxu0 0
      %829 = vmatpush1.bf16.msra.mxu0 0
      %830 = vmatprep.mubr.bf16.mxu0 0
      %831 = vmatmul.mubr.bf16.gmra.mrb[0].mxu0 %v797
      %v832 = vpop.f32.mrb[0].mxu0
      %v833 = vadd.f32 0.0, %v832
      %v834 = vpop.f32.mrb[0].mxu0
      %v835 = vpop.f32.mrb[0].mxu0
      %v836 = vadd.f32 0.0, %v835
      %v837 = vpop.f32.mrb[0].mxu0
      %838 = vdwg.mxu0
      %v839 = vadd.f32 %v788, %v485
      %v840 = vadd.f32 %v790, %v485
      %v841 = vlog2.pop %v833
      %v842 = vmul.f32 %v841, 0.6931472
      %v843 = vlog2.pop %v836
      %v844 = vmul.f32 %v843, 0.6931472
      %v845 = vadd.f32 %v839, %v842
      %v846 = vadd.f32 %v840, %v844
      %p847 = scmp.ge.s32.totalorder %s780, 1
      %v848 = vstv %s780
      %vm849 = vcmp.lt.s32.totalorder %v848, %v319
      %vm850 = vcmp.lt.s32.totalorder %v848, %v320
      %s851 = scalar_select %p847, 1, 0
      %v852 = vstv %s851
      %vm853 = vcmp.eq.s32.totalorder %v852, 1
      %vm854 = vmand %vm853, %vm849
      %vm855 = vmand %vm853, %vm850
      %v856 = vsel %vm854, 1, 0
      %v857 = vsel %vm855, 1, 0
      %858 = vset.pattern.permute.xlu0 0
      %859 = vperm.xlu0 %858, %v856
      %v860 = vpop.permute.xlu0 %859
      %861 = vset.pattern.permute.xlu0 0
      %862 = vperm.xlu0 %861, %v857
      %v863 = vpop.permute.xlu0 %862
      %vm864 = vcmp.eq.s32.totalorder %v860, 1
      %vm865 = vcmp.eq.s32.totalorder %v863, 1
      %v866 = vsel %vm864, %v845, %v778
      %v867 = vsel %vm865, %v846, %v779
      %s868 = sadd.s32 %s364, 5
      %s869 = scalar_lea.vmem [#allocation2], 40
      %v870 = vld [vmem:[%s869] sm:$0xff]
      %v871 = vunpack.c.l.bf16 %v870
      %v872 = vunpack.c.h.bf16 %v870
      %v873 = vadd.f32 %v866, %v871
      %v874 = vadd.f32 %v867, %v872
      %875 = vmax.xlane.f32.xlu0 %v873
      %v876 = vpop.xlane.xlu0 %875
      %877 = vmax.xlane.f32.xlu0 %v874
      %v878 = vpop.xlane.xlu0 %877
      %v879 = vsub.f32 %v873, %v876
      %v880 = vsub.f32 %v874, %v878
      %v881 = vmul.f32 %v879, 1.442695
      %v882 = vpow.pop %v881
      %v883 = vmul.f32 %v880, 1.442695
      %v884 = vpow.pop %v883
      %v885 = vpack.c.bf16 %v884, %v882
      %886 = vmatprep.subr.bf16.mxu0 0
      %887 = vmatpush1.bf16.msra.mxu0 %v424
      %888 = vmatprep.subr.bf16.mxu0 0
      %889 = vmatpush1.bf16.msra.mxu0 %v425
      %890 = vmatprep.subr.bf16.mxu0 0
      %891 = vmatpush1.bf16.msra.mxu0 %v426
      %892 = vmatprep.subr.bf16.mxu0 0
      %893 = vmatpush1.bf16.msra.mxu0 %v427
      %894 = vmatprep.subr.bf16.mxu0 0
      %895 = vmatpush1.bf16.msra.mxu0 %v428
      %896 = vmatprep.subr.bf16.mxu0 0
      %897 = vmatpush1.bf16.msra.mxu0 %v429
      %898 = vmatprep.subr.bf16.mxu0 0
      %899 = vmatpush1.bf16.msra.mxu0 %v430
      %900 = vmatprep.subr.bf16.mxu0 0
      %901 = vmatpush1.bf16.msra.mxu0 %v431
      %902 = vmatprep.subr.bf16.mxu0 0
      %903 = vmatpush1.bf16.msra.mxu0 0
      %904 = vmatprep.subr.bf16.mxu0 0
      %905 = vmatpush1.bf16.msra.mxu0 0
      %906 = vmatprep.subr.bf16.mxu0 0
      %907 = vmatpush1.bf16.msra.mxu0 0
      %908 = vmatprep.subr.bf16.mxu0 0
      %909 = vmatpush1.bf16.msra.mxu0 0
      %910 = vmatprep.subr.bf16.mxu0 0
      %911 = vmatpush1.bf16.msra.mxu0 0
      %912 = vmatprep.subr.bf16.mxu0 0
      %913 = vmatpush1.bf16.msra.mxu0 0
      %914 = vmatprep.subr.bf16.mxu0 0
      %915 = vmatpush1.bf16.msra.mxu0 0
      %916 = vmatprep.subr.bf16.mxu0 0
      %917 = vmatpush1.bf16.msra.mxu0 0
      %918 = vmatprep.mubr.bf16.mxu0 0
      %919 = vmatmul.mubr.bf16.gmra.mrb[0].mxu0 %v885
      %v920 = vpop.f32.mrb[0].mxu0
      %v921 = vadd.f32 0.0, %v920
      %v922 = vpop.f32.mrb[0].mxu0
      %v923 = vpop.f32.mrb[0].mxu0
      %v924 = vadd.f32 0.0, %v923
      %v925 = vpop.f32.mrb[0].mxu0
      %926 = vdwg.mxu0
      %v927 = vadd.f32 %v876, %v485
      %v928 = vadd.f32 %v878, %v485
      %v929 = vlog2.pop %v921
      %v930 = vmul.f32 %v929, 0.6931472
      %v931 = vlog2.pop %v924
      %v932 = vmul.f32 %v931, 0.6931472
      %v933 = vadd.f32 %v927, %v930
      %v934 = vadd.f32 %v928, %v932
      %p935 = scmp.ge.s32.totalorder %s868, 1
      %v936 = vstv %s868
      %vm937 = vcmp.lt.s32.totalorder %v936, %v319
      %vm938 = vcmp.lt.s32.totalorder %v936, %v320
      %s939 = scalar_select %p935, 1, 0
      %v940 = vstv %s939
      %vm941 = vcmp.eq.s32.totalorder %v940, 1
      %vm942 = vmand %vm941, %vm937
      %vm943 = vmand %vm941, %vm938
      %v944 = vsel %vm942, 1, 0
      %v945 = vsel %vm943, 1, 0
      %946 = vset.pattern.permute.xlu0 0
      %947 = vperm.xlu0 %946, %v944
      %v948 = vpop.permute.xlu0 %947
      %949 = vset.pattern.permute.xlu0 0
      %950 = vperm.xlu0 %949, %v945
      %v951 = vpop.permute.xlu0 %950
      %vm952 = vcmp.eq.s32.totalorder %v948, 1
      %vm953 = vcmp.eq.s32.totalorder %v951, 1
      %v954 = vsel %vm952, %v933, %v866
      %v955 = vsel %vm953, %v934, %v867
      %s956 = sadd.s32 %s364, 6
      %s957 = scalar_lea.vmem [#allocation2], 48
      %v958 = vld [vmem:[%s957] sm:$0xff]
      %v959 = vunpack.c.l.bf16 %v958
      %v960 = vunpack.c.h.bf16 %v958
      %v961 = vadd.f32 %v954, %v959
      %v962 = vadd.f32 %v955, %v960
      %963 = vmax.xlane.f32.xlu0 %v961
      %v964 = vpop.xlane.xlu0 %963
      %965 = vmax.xlane.f32.xlu0 %v962
      %v966 = vpop.xlane.xlu0 %965
      %v967 = vsub.f32 %v961, %v964
      %v968 = vsub.f32 %v962, %v966
      %v969 = vmul.f32 %v967, 1.442695
      %v970 = vpow.pop %v969
      %v971 = vmul.f32 %v968, 1.442695
      %v972 = vpow.pop %v971
      %v973 = vpack.c.bf16 %v972, %v970
      %974 = vmatprep.subr.bf16.mxu0 0
      %975 = vmatpush1.bf16.msra.mxu0 %v424
      %976 = vmatprep.subr.bf16.mxu0 0
      %977 = vmatpush1.bf16.msra.mxu0 %v425
      %978 = vmatprep.subr.bf16.mxu0 0
      %979 = vmatpush1.bf16.msra.mxu0 %v426
      %980 = vmatprep.subr.bf16.mxu0 0
      %981 = vmatpush1.bf16.msra.mxu0 %v427
      %982 = vmatprep.subr.bf16.mxu0 0
      %983 = vmatpush1.bf16.msra.mxu0 %v428
      %984 = vmatprep.subr.bf16.mxu0 0
      %985 = vmatpush1.bf16.msra.mxu0 %v429
      %986 = vmatprep.subr.bf16.mxu0 0
      %987 = vmatpush1.bf16.msra.mxu0 %v430
      %988 = vmatprep.subr.bf16.mxu0 0
      %989 = vmatpush1.bf16.msra.mxu0 %v431
      %990 = vmatprep.subr.bf16.mxu0 0
      %991 = vmatpush1.bf16.msra.mxu0 0
      %992 = vmatprep.subr.bf16.mxu0 0
      %993 = vmatpush1.bf16.msra.mxu0 0
      %994 = vmatprep.subr.bf16.mxu0 0
      %995 = vmatpush1.bf16.msra.mxu0 0
      %996 = vmatprep.subr.bf16.mxu0 0
      %997 = vmatpush1.bf16.msra.mxu0 0
      %998 = vmatprep.subr.bf16.mxu0 0
      %999 = vmatpush1.bf16.msra.mxu0 0
      %1000 = vmatprep.subr.bf16.mxu0 0
      %1001 = vmatpush1.bf16.msra.mxu0 0
      %1002 = vmatprep.subr.bf16.mxu0 0
      %1003 = vmatpush1.bf16.msra.mxu0 0
      %1004 = vmatprep.subr.bf16.mxu0 0
      %1005 = vmatpush1.bf16.msra.mxu0 0
      %1006 = vmatprep.mubr.bf16.mxu0 0
      %1007 = vmatmul.mubr.bf16.gmra.mrb[0].mxu0 %v973
      %v1008 = vpop.f32.mrb[0].mxu0
      %v1009 = vadd.f32 0.0, %v1008
      %v1010 = vpop.f32.mrb[0].mxu0
      %v1011 = vpop.f32.mrb[0].mxu0
      %v1012 = vadd.f32 0.0, %v1011
      %v1013 = vpop.f32.mrb[0].mxu0
      %1014 = vdwg.mxu0
      %v1015 = vadd.f32 %v964, %v485
      %v1016 = vadd.f32 %v966, %v485
      %v1017 = vlog2.pop %v1009
      %v1018 = vmul.f32 %v1017, 0.6931472
      %v1019 = vlog2.pop %v1012
      %v1020 = vmul.f32 %v1019, 0.6931472
      %v1021 = vadd.f32 %v1015, %v1018
      %v1022 = vadd.f32 %v1016, %v1020
      %p1023 = scmp.ge.s32.totalorder %s956, 1
      %v1024 = vstv %s956
      %vm1025 = vcmp.lt.s32.totalorder %v1024, %v319
      %vm1026 = vcmp.lt.s32.totalorder %v1024, %v320
      %s1027 = scalar_select %p1023, 1, 0
      %v1028 = vstv %s1027
      %vm1029 = vcmp.eq.s32.totalorder %v1028, 1
      %vm1030 = vmand %vm1029, %vm1025
      %vm1031 = vmand %vm1029, %vm1026
      %v1032 = vsel %vm1030, 1, 0
      %v1033 = vsel %vm1031, 1, 0
      %1034 = vset.pattern.permute.xlu0 0
      %1035 = vperm.xlu0 %1034, %v1032
      %v1036 = vpop.permute.xlu0 %1035
      %1037 = vset.pattern.permute.xlu0 0
      %1038 = vperm.xlu0 %1037, %v1033
      %v1039 = vpop.permute.xlu0 %1038
      %vm1040 = vcmp.eq.s32.totalorder %v1036, 1
      %vm1041 = vcmp.eq.s32.totalorder %v1039, 1
      %v1042 = vsel %vm1040, %v1021, %v954
      %v1043 = vsel %vm1041, %v1022, %v955
      %s1044 = sadd.s32 %s364, 7
      %s1045 = scalar_lea.vmem [#allocation2], 56
      %v1046 = vld [vmem:[%s1045] sm:$0xff]
      %v1047 = vunpack.c.l.bf16 %v1046
      %v1048 = vunpack.c.h.bf16 %v1046
      %v1049 = vadd.f32 %v1042, %v1047
      %v1050 = vadd.f32 %v1043, %v1048
      %1051 = vmax.xlane.f32.xlu0 %v1049
      %v1052 = vpop.xlane.xlu0 %1051
      %1053 = vmax.xlane.f32.xlu0 %v1050
      %v1054 = vpop.xlane.xlu0 %1053
      %v1055 = vsub.f32 %v1049, %v1052
      %v1056 = vsub.f32 %v1050, %v1054
      %v1057 = vmul.f32 %v1055, 1.442695
      %v1058 = vpow.pop %v1057
      %v1059 = vmul.f32 %v1056, 1.442695
      %v1060 = vpow.pop %v1059
      %v1061 = vpack.c.bf16 %v1060, %v1058
      %1062 = vmatprep.subr.bf16.mxu0 0
      %1063 = vmatpush1.bf16.msra.mxu0 %v424
      %1064 = vmatprep.subr.bf16.mxu0 0
      %1065 = vmatpush1.bf16.msra.mxu0 %v425
      %1066 = vmatprep.subr.bf16.mxu0 0
      %1067 = vmatpush1.bf16.msra.mxu0 %v426
      %1068 = vmatprep.subr.bf16.mxu0 0
      %1069 = vmatpush1.bf16.msra.mxu0 %v427
      %1070 = vmatprep.subr.bf16.mxu0 0
      %1071 = vmatpush1.bf16.msra.mxu0 %v428
      %1072 = vmatprep.subr.bf16.mxu0 0
      %1073 = vmatpush1.bf16.msra.mxu0 %v429
      %1074 = vmatprep.subr.bf16.mxu0 0
      %1075 = vmatpush1.bf16.msra.mxu0 %v430
      %1076 = vmatprep.subr.bf16.mxu0 0
      %1077 = vmatpush1.bf16.msra.mxu0 %v431
      %1078 = vmatprep.subr.bf16.mxu0 0
      %1079 = vmatpush1.bf16.msra.mxu0 0
      %1080 = vmatprep.subr.bf16.mxu0 0
      %1081 = vmatpush1.bf16.msra.mxu0 0
      %1082 = vmatprep.subr.bf16.mxu0 0
      %1083 = vmatpush1.bf16.msra.mxu0 0
      %1084 = vmatprep.subr.bf16.mxu0 0
      %1085 = vmatpush1.bf16.msra.mxu0 0
      %1086 = vmatprep.subr.bf16.mxu0 0
      %1087 = vmatpush1.bf16.msra.mxu0 0
      %1088 = vmatprep.subr.bf16.mxu0 0
      %1089 = vmatpush1.bf16.msra.mxu0 0
      %1090 = vmatprep.subr.bf16.mxu0 0
      %1091 = vmatpush1.bf16.msra.mxu0 0
      %1092 = vmatprep.subr.bf16.mxu0 0
      %1093 = vmatpush1.bf16.msra.mxu0 0
      %1094 = vmatprep.mubr.bf16.mxu0 0
      %1095 = vmatmul.mubr.bf16.gmra.mrb[0].mxu0 %v1061
      %v1096 = vpop.f32.mrb[0].mxu0
      %v1097 = vadd.f32 0.0, %v1096
      %v1098 = vpop.f32.mrb[0].mxu0
      %v1099 = vpop.f32.mrb[0].mxu0
      %v1100 = vadd.f32 0.0, %v1099
      %v1101 = vpop.f32.mrb[0].mxu0
      %1102 = vdwg.mxu0
      %v1103 = vadd.f32 %v1052, %v485
      %v1104 = vadd.f32 %v1054, %v485
      %v1105 = vlog2.pop %v1097
      %v1106 = vmul.f32 %v1105, 0.6931472
      %v1107 = vlog2.pop %v1100
      %v1108 = vmul.f32 %v1107, 0.6931472
      %v1109 = vadd.f32 %v1103, %v1106
      %v1110 = vadd.f32 %v1104, %v1108
      %p1111 = scmp.ge.s32.totalorder %s1044, 1
      %v1112 = vstv %s1044
      %vm1113 = vcmp.lt.s32.totalorder %v1112, %v319
      %vm1114 = vcmp.lt.s32.totalorder %v1112, %v320
      %s1115 = scalar_select %p1111, 1, 0
      %v1116 = vstv %s1115
      %vm1117 = vcmp.eq.s32.totalorder %v1116, 1
      %vm1118 = vmand %vm1117, %vm1113
      %vm1119 = vmand %vm1117, %vm1114
      %v1120 = vsel %vm1118, 1, 0
      %v1121 = vsel %vm1119, 1, 0
      %1122 = vset.pattern.permute.xlu0 0
      %1123 = vperm.xlu0 %1122, %v1120
      %v1124 = vpop.permute.xlu0 %1123
      %1125 = vset.pattern.permute.xlu0 0
      %1126 = vperm.xlu0 %1125, %v1121
      %v1127 = vpop.permute.xlu0 %1126
      %vm1128 = vcmp.eq.s32.totalorder %v1124, 1
      %vm1129 = vcmp.eq.s32.totalorder %v1127, 1
      %v1130 = vsel %vm1128, %v1109, %v1042
      %v1131 = vsel %vm1129, %v1110, %v1043
      %1132 = vst [vmem:[#allocation3] sm:$0xff] %v1130
      %1133 = vst [vmem:[#allocation3 + $0x8] sm:$0xff] %v1131
    $region49: #{tpu_custom_call.1} parent=1 // pred_fallthru
      _
    // Predicated region
    $region50: #{tpu_custom_call.1} parent=1 // pred_check
      %p1134 = pneg %p338
    $region51: #{tpu_custom_call.1} parent=1 // pred_check_branch
      %1136 = sbr.rel (%p1134) target = $region53
    $region52: #{tpu_custom_call.1} parent=1 // pred_region
      %v1137 = vld [vmem:[#allocation3] sm:$0xff]
      %v1138 = vld [vmem:[#allocation3 + $0x8] sm:$0xff]
      %s1139 = smul.u32 0, 16
      %v1140 = vlaneseq
      %v1141 = vshrl.u32 %v1140, 7
      %v1142 = vadd.s32 %v1141, 8
      %v1143 = vstv %s1139
      %v1144 = vadd.s32 %v1143, %v1141
      %v1145 = vadd.s32 %v1143, %v1142
      %vm1146 = vcmp.lt.s32.totalorder %v1144, 2
      %vm1147 = vcmp.lt.s32.totalorder %v1145, 2
      %v1148 = vsel %vm1146, %v1137, 0.0
      %v1149 = vsel %vm1147, %v1138, 0.0
      %1152 = vrot.lane.b32.xlu0 %v1148, 123
      %v1153 = vpop.permute.xlu0 %1152
      %1154 = vrot.lane.b32.xlu0 %v1149, 123
      %v1155 = vpop.permute.xlu0 %1154
      %vm1158 = vcmask 7168
      %v1159 = vsel %vm1158, %v1153, 0.0
      %v1160 = vsel %vm1158, %v1155, 0.0
      %v1161 = vadd.f32 %v1159, %v1160
      %1162 = vadd.xlane.f32.xlu0 %v1161
      %v1163 = vpop.xlane.xlu0 %1162
      %v1164 = vrot.slane %v1163, 4
      %v1165 = vadd.f32 %v1163, %v1164
      %v1166 = vrot.slane %v1165, 2
      %v1167 = vadd.f32 %v1165, %v1166
      %v1168 = vrot.slane %v1167, 1
      %v1169 = vadd.f32 %v1167, %v1168
      %s1170 = vtos %v1169
      %v1171 = vstv %s1170
      %v1172 = vadd.f32 %v1171, 0.0
      %1173 = vst [vmem:[#allocation12] sm:$0x1] %v1172
    $region53: #{tpu_custom_call.1} parent=1 // pred_fallthru
      _
    // Predicated region
    $region54: #{tpu_custom_call.1} parent=1 // pred_check
      _
    $region55: #{tpu_custom_call.1} parent=1 // pred_check_branch
      %1175 = sbr.rel (0) target = $region57
    $region56: #{tpu_custom_call.1} parent=1 // pred_region
      %s1177 = ssub.s32 16, 16
      %1178 = vsyncadd [#allocation8], %s1177
      %s1180 = sshll.u32 [#allocation12], 4
      %s1181 = int_to_ptr.vmem [resolvable:$true] %s1180
      %1183 = dma.vmem_to_hbm [thread:$0]  %s1181, 16, %s8, [#allocation8]
    $region57: #{tpu_custom_call.1} parent=1 // pred_fallthru
      _
    // Predicated region
    $region58: #{tpu_custom_call.1} parent=1 // pred_check
      _
    $region59: #{tpu_custom_call.1} parent=1 // pred_check_branch
      %1185 = sbr.rel (0) target = $region61
    $region60: #{tpu_custom_call.1} parent=1 // pred_region
      %1186 = dma.done [#allocation8], 16
    $region61: #{tpu_custom_call.1} parent=1 // pred_fallthru
      _
    %1187 = vsyncpa [#allocation7], 1
    %1188 = vsyncpa [#allocation10], 1
    %1189 = vsyncpa [#allocation8], 1

</llo_original>
